<compile_context>
chip_gen: v7x
topology: tpu7x:2x2x1
jax: 0.10.0
libtpu: 0.0.40
codegen_flags: <defaults>
</compile_context>

<pallas_src>
import numpy as np
import jax
import jax.numpy as jnp
from jax.experimental import pallas as pl
from jax.experimental.pallas import tpu as pltpu

# ---------------- configuration (small, consistent with the module) ----------
B, CIN, H, W = 2, 4, 8, 8          # input feature map (B, Cin, H, W)
K = 4                              # K-regular graph neighbours
COUT = 8                           # output channels
RANK = 12                          # LowRankECC default rank
DELTA = 10.0                       # LowRankECC default delta
LEAK = 0.2                         # LeakyReLU negative slope
KS = 3                             # local conv kernel size

N = H * W                          # pixels per image            (64)
BN = B * N                         # pixels per batch            (128)
M = K * BN                         # graph edges, row order (k, b, n)   (512)
SEG = 128                          # 128-lane-aligned segment stride in packed ECC weight


# ------------------------------ Pallas kernel --------------------------------
def gconv_kernel(vidx_ref, h_ref, patch_ref, w0_ref, b0_ref, wcat_ref, bcat_ref,
                 et_ref, s2_ref, tt_ref, sel_ref, wloc_ref, bias_ref, out_ref):
    f32 = jnp.float32
    h_all = h_ref[...]                                                   # (CIN, BN)

    # ---- neighbour gather as a one-hot MXU matmul (no XLA gather) -----------
    c_iota = jax.lax.broadcasted_iota(jnp.int32, (BN, M), 0)             # h_all column id
    vsel = (c_iota == vidx_ref[...]).astype(f32)                         # (BN, M) one-hot
    vertex = jnp.dot(h_all, vsel, preferred_element_type=f32)            # (CIN, M)
    center = jnp.concatenate([h_all] * K, axis=1)                        # (CIN, M), row order (k,b,n)
    label = vertex - center                                              # (CIN, M)

    # ---- LowRankECC MLP, feature-major, fused/packed weights ----------------
    theta = jnp.dot(w0_ref[...], label, preferred_element_type=f32) + b0_ref[...]
    theta = jnp.where(theta >= 0.0, theta, LEAK * theta)                 # LeakyReLU
    cat = jnp.dot(wcat_ref[...], theta, preferred_element_type=f32) + bcat_ref[...]  # (3*SEG, M)
    thetaL = cat[0:COUT * RANK, :]                                       # (96, M)
    thetaR = cat[SEG:SEG + CIN * RANK, :]                                # (48, M)
    kappa = cat[2 * SEG:2 * SEG + RANK, :]                               # (12, M)

    # t[r, m] = sum_ci thetaR[ci*RANK+r, m] * label[ci, m]   (mb_vertex == label in the module)
    lbl_rep = jnp.dot(et_ref[...], label, preferred_element_type=f32)          # (48, M)
    t = jnp.dot(s2_ref[...], lbl_rep * thetaR, preferred_element_type=f32)     # (12, M)
    s = kappa * t                                                              # (12, M)
    # out8[co, m] = sum_r thetaL[co*RANK+r, m] * s[r, m]
    s_rep = jnp.dot(tt_ref[...], s, preferred_element_type=f32)                # (96, M)
    out8 = jnp.dot(sel_ref[...], thetaL * s_rep, preferred_element_type=f32)   # (COUT, M)

    gamma = jnp.exp(-jnp.sum(label * label, axis=0, keepdims=True) * (1.0 / DELTA))
    ecc = out8 * gamma                                                   # (COUT, M)

    # ---- mean over K neighbours: rows ordered (k,b,n) -> 128-aligned slices --
    nl = ecc[:, 0:BN]
    for k in range(1, K):
        nl = nl + ecc[:, k * BN:(k + 1) * BN]
    nl = nl * (1.0 / K)                                                  # (COUT, BN)

    # ---- local 3x3 reflect conv (im2col matmul) + fused epilogue ------------
    hl = jnp.dot(wloc_ref[...], patch_ref[...], preferred_element_type=f32)    # (COUT, BN)
    out_ref[...] = ((nl + hl) * 0.5 + bias_ref[...]).astype(out_ref.dtype)


def graph_conv_pallas(vidx, h_all, patches_t, kp):
    args = (vidx, h_all, patches_t, kp["w0"], kp["b0"], kp["wcat"], kp["bcat"],
            kp["et"], kp["s2"], kp["tt"], kp["sel"], kp["wloc"], kp["bias"])
    spec = lambda a: pl.BlockSpec(a.shape, lambda i: (0, 0))
    return pl.pallas_call(
        gconv_kernel,
        out_shape=jax.ShapeDtypeStruct((COUT, BN), jnp.float32),
        grid=(1,),                                   # single grid step: no per-step overhead
        in_specs=[spec(a) for a in args],
        out_specs=pl.BlockSpec((COUT, BN), lambda i: (0, 0)),
        compiler_params=pltpu.CompilerParams(
            dimension_semantics=("arbitrary",),
            vmem_limit_bytes=32 * 1024 * 1024),
    )(*args)


# ------------------------------ host-side glue -------------------------------
# compile-time im2col gather indices into the reflect-padded, flattened spatial dim
_YY, _XX = np.meshgrid(np.arange(H), np.arange(W), indexing="ij")
PATCH_IDX = np.stack([(_YY + dy) * (W + 2) + (_XX + dx)
                      for dy in range(KS) for dx in range(KS)],
                     axis=0).reshape(KS * KS, N).astype(np.int32)


def graph_conv_forward(h, edge, kp):
    """Layout plumbing only; all math happens inside the single Pallas kernel."""
    h_all = h.reshape(B, CIN, N).transpose(1, 0, 2).reshape(CIN, BN)          # (CIN, B*N)
    ekbn = edge.reshape(B, K, N).transpose(1, 0, 2).astype(jnp.int32)         # (K, B, N)
    vidx = (ekbn + (jnp.arange(B, dtype=jnp.int32) * N)[None, :, None]).reshape(1, M)
    hp = jnp.pad(h, ((0, 0), (0, 0), (1, 1), (1, 1)), mode="reflect")
    hp = hp.reshape(B, CIN, (H + 2) * (W + 2))
    patches = hp[:, :, PATCH_IDX]                                             # (B, CIN, 9, N)
    patches_t = patches.transpose(1, 2, 0, 3).reshape(CIN * KS * KS, BN)      # (36, B*N)
    out = graph_conv_pallas(vidx, h_all, patches_t, kp)                       # (COUT, B*N)
    return out.reshape(COUT, B, H, W).transpose(1, 0, 2, 3)                   # (B, COUT, H, W)


# ------------------------------ parameters -----------------------------------
def init_params(key):
    ks_ = jax.random.split(key, 9)

    def ubias(k, fan_in, n):
        bound = 1.0 / np.sqrt(fan_in)
        return jax.random.uniform(k, (n,), jnp.float32, -bound, bound)

    p = {}
    # weights kept in PyTorch (out, in) orientation
    p["w0"] = jax.random.normal(ks_[0], (CIN, CIN), jnp.float32) * np.sqrt(1.0 / CIN)
    p["b0"] = ubias(ks_[1], CIN, CIN)
    p["wl"] = jax.random.normal(ks_[2], (RANK * COUT, CIN), jnp.float32) * np.sqrt(1.0 / (CIN * RANK * COUT))
    p["bl"] = ubias(ks_[3], CIN, RANK * COUT)
    p["wr"] = jax.random.normal(ks_[4], (RANK * CIN, CIN), jnp.float32) * np.sqrt(1.0 / (CIN * RANK * CIN))
    p["br"] = ubias(ks_[5], CIN, RANK * CIN)
    p["wk"] = jax.random.normal(ks_[6], (RANK, CIN), jnp.float32) * np.sqrt(2.0 / RANK)
    p["bk"] = ubias(ks_[7], CIN, RANK)
    p["conv_w"] = jax.random.normal(ks_[8], (COUT, CIN, KS, KS), jnp.float32) * np.sqrt(1.0 / (CIN * KS * KS))
    p["bias"] = jnp.zeros((1, COUT, 1, 1), jnp.float32)
    return p


def pack_kernel_params(p):
    """One-time host-side packing of weights + constant selection matrices."""
    wl, bl = np.asarray(p["wl"]), np.asarray(p["bl"])
    wr, br = np.asarray(p["wr"]), np.asarray(p["br"])
    wk, bk = np.asarray(p["wk"]), np.asarray(p["bk"])
    # fused FC_L | FC_R | FC_k weight, each segment starting at a 128-lane boundary
    wcat = np.zeros((3 * SEG, CIN), np.float32)
    bcat = np.zeros((3 * SEG, 1), np.float32)
    wcat[0:COUT * RANK] = wl;               bcat[0:COUT * RANK, 0] = bl
    wcat[SEG:SEG + CIN * RANK] = wr;        bcat[SEG:SEG + CIN * RANK, 0] = br
    wcat[2 * SEG:2 * SEG + RANK] = wk;      bcat[2 * SEG:2 * SEG + RANK, 0] = bk
    # constant expansion / selection matrices -> keep all reductions on the MXU
    et = np.zeros((CIN * RANK, CIN), np.float32)
    et[np.arange(CIN * RANK), np.arange(CIN * RANK) // RANK] = 1.0
    s2 = np.zeros((RANK, CIN * RANK), np.float32)
    s2[np.arange(CIN * RANK) % RANK, np.arange(CIN * RANK)] = 1.0
    tt = np.zeros((COUT * RANK, RANK), np.float32)
    tt[np.arange(COUT * RANK), np.arange(COUT * RANK) % RANK] = 1.0
    sel = np.zeros((COUT, COUT * RANK), np.float32)
    sel[np.arange(COUT * RANK) // RANK, np.arange(COUT * RANK)] = 1.0
    return {
        "w0": jnp.asarray(p["w0"]),
        "b0": jnp.asarray(p["b0"]).reshape(CIN, 1),
        "wcat": jnp.asarray(wcat), "bcat": jnp.asarray(bcat),
        "et": jnp.asarray(et), "s2": jnp.asarray(s2),
        "tt": jnp.asarray(tt), "sel": jnp.asarray(sel),
        "wloc": jnp.asarray(p["conv_w"]).reshape(COUT, CIN * KS * KS),
        "bias": jnp.asarray(p["bias"]).reshape(COUT, 1),
    }


# ------------------------------ pure-JAX reference ---------------------------
def reference_forward(h, edge, p):
    prec = jax.lax.Precision.HIGHEST
    hf = h.reshape(B, CIN, N)
    ef = edge.reshape(B, K, N)
    # TODO(synk): getLabelVertex is not in the provided source; standard GCDN
    # definition used: vertex = h[neighbour], label = vertex - h[center].
    hfe = jnp.broadcast_to(hf[:, None, :, :], (B, K, CIN, N))
    efe = jnp.broadcast_to(ef[:, :, None, :], (B, K, CIN, N))
    vertex = jnp.take_along_axis(hfe, efe, axis=3).transpose(0, 1, 3, 2)      # (B,K,N,CIN)
    center = hf.transpose(0, 2, 1)[:, None, :, :]
    label = (vertex - center).reshape(-1, CIN)                                # rows (b,k,n)
    theta = jnp.dot(label, p["w0"].T, precision=prec) + p["b0"]
    theta = jnp.where(theta >= 0.0, theta, LEAK * theta)
    thetaL = (jnp.dot(theta, p["wl"].T, precision=prec) + p["bl"]).reshape(-1, COUT, RANK)
    thetaR = (jnp.dot(theta, p["wr"].T, precision=prec) + p["br"]).reshape(-1, CIN, RANK)
    kappa = jnp.dot(theta, p["wk"].T, precision=prec) + p["bk"]
    # NOTE: the original forward feeds mb_vertex = label (not vertex); reproduced here.
    t = jnp.einsum("mcr,mc->mr", thetaR, label, precision=prec)
    out = jnp.einsum("mor,mr->mo", thetaL, kappa * t, precision=prec)
    gamma = jnp.exp(-jnp.sum(label ** 2, axis=1, keepdims=True) / DELTA)
    hNL = (gamma * out).reshape(B, K, N, COUT).mean(axis=1)                   # (B,N,COUT)
    hNL = hNL.transpose(0, 2, 1).reshape(B, COUT, H, W)
    hp = jnp.pad(h, ((0, 0), (0, 0), (1, 1), (1, 1)), mode="reflect")
    hL = jax.lax.conv_general_dilated(hp, p["conv_w"], (1, 1), "VALID",
                                      dimension_numbers=("NCHW", "OIHW", "NCHW"),
                                      precision=prec)
    return (hNL + hL) / 2.0 + p["bias"]


# ------------------------------ main ------------------------------------------
if __name__ == "__main__":
    key = jax.random.PRNGKey(0)
    kpar, kh, ke = jax.random.split(key, 3)
    params = init_params(kpar)
    kparams = pack_kernel_params(params)

    h = jax.random.normal(kh, (B, CIN, H, W), jnp.float32)
    edge = jax.random.randint(ke, (B, K, H, W), 0, N, dtype=jnp.int32)

    fwd = jax.jit(lambda hh, ee: graph_conv_forward(hh, ee, kparams))
    out = jax.block_until_ready(fwd(h, edge))

    ref = jax.block_until_ready(jax.jit(lambda hh, ee: reference_forward(hh, ee, params))(h, edge))
    assert out.shape == (B, COUT, H, W)
    err = float(jnp.max(jnp.abs(out - ref)))
    assert err < 1e-3, err
    print("KERNEL_OK")
</pallas_src>

<mosaic_0001>
module attributes {stable_mosaic.version = 11 : i64} {
  func.func @gconv_kernel(%arg0: i32, %arg1: memref<1x512xi32, #tpu.memory_space<vmem>>, %arg2: memref<4x128xf32, #tpu.memory_space<vmem>>, %arg3: memref<36x128xf32, #tpu.memory_space<vmem>>, %arg4: memref<4x4xf32, #tpu.memory_space<vmem>>, %arg5: memref<4x1xf32, #tpu.memory_space<vmem>>, %arg6: memref<384x4xf32, #tpu.memory_space<vmem>>, %arg7: memref<384x1xf32, #tpu.memory_space<vmem>>, %arg8: memref<48x4xf32, #tpu.memory_space<vmem>>, %arg9: memref<12x48xf32, #tpu.memory_space<vmem>>, %arg10: memref<96x12xf32, #tpu.memory_space<vmem>>, %arg11: memref<8x96xf32, #tpu.memory_space<vmem>>, %arg12: memref<8x36xf32, #tpu.memory_space<vmem>>, %arg13: memref<8x1xf32, #tpu.memory_space<vmem>>, %arg14: memref<8x128xf32, #tpu.memory_space<vmem>>) attributes {dimension_semantics = [#tpu.dimension_semantics<arbitrary>], iteration_bounds = array<i64: 1>, scalar_prefetch = 0 : i64, scratch_operands = 0 : i64, tpu.core_type = #tpu.core_type<tc>, window_params = [{pipeline_mode = #tpu.pipeline_mode<synchronous>, transform_indices = @transform_0, window_bounds = array<i64: 1, 512>}, {pipeline_mode = #tpu.pipeline_mode<synchronous>, transform_indices = @transform_1, window_bounds = array<i64: 4, 128>}, {pipeline_mode = #tpu.pipeline_mode<synchronous>, transform_indices = @transform_2, window_bounds = array<i64: 36, 128>}, {pipeline_mode = #tpu.pipeline_mode<synchronous>, transform_indices = @transform_3, window_bounds = array<i64: 4, 4>}, {pipeline_mode = #tpu.pipeline_mode<synchronous>, transform_indices = @transform_4, window_bounds = array<i64: 4, 1>}, {pipeline_mode = #tpu.pipeline_mode<synchronous>, transform_indices = @transform_5, window_bounds = array<i64: 384, 4>}, {pipeline_mode = #tpu.pipeline_mode<synchronous>, transform_indices = @transform_6, window_bounds = array<i64: 384, 1>}, {pipeline_mode = #tpu.pipeline_mode<synchronous>, transform_indices = @transform_7, window_bounds = array<i64: 48, 4>}, {pipeline_mode = #tpu.pipeline_mode<synchronous>, transform_indices = @transform_8, window_bounds = array<i64: 12, 48>}, {pipeline_mode = #tpu.pipeline_mode<synchronous>, transform_indices = @transform_9, window_bounds = array<i64: 96, 12>}, {pipeline_mode = #tpu.pipeline_mode<synchronous>, transform_indices = @transform_10, window_bounds = array<i64: 8, 96>}, {pipeline_mode = #tpu.pipeline_mode<synchronous>, transform_indices = @transform_11, window_bounds = array<i64: 8, 36>}, {pipeline_mode = #tpu.pipeline_mode<synchronous>, transform_indices = @transform_12, window_bounds = array<i64: 8, 1>}, {pipeline_mode = #tpu.pipeline_mode<synchronous>, transform_indices = @transform_13, window_bounds = array<i64: 8, 128>}]} {
    %c0 = arith.constant 0 : index
    %c0_0 = arith.constant 0 : index
    %0 = vector.load %arg2[%c0, %c0_0] : memref<4x128xf32, #tpu.memory_space<vmem>>, vector<4x128xf32>
    %1 = tpu.iota {dimensions = array<i32: 0>} : vector<128x512xi32>
    %c0_1 = arith.constant 0 : index
    %c0_2 = arith.constant 0 : index
    %2 = vector.load %arg1[%c0_1, %c0_2] : memref<1x512xi32, #tpu.memory_space<vmem>>, vector<1x512xi32>
    %3 = vector.broadcast %2 : vector<1x512xi32> to vector<128x512xi32>
    %4 = arith.cmpi eq, %1, %3 : vector<128x512xi32>
    %5 = arith.extui %4 : vector<128x512xi1> to vector<128x512xi32>
    %6 = arith.sitofp %5 : vector<128x512xi32> to vector<128x512xf32>
    %cst = arith.constant dense<0.000000e+00> : vector<4x512xf32>
    %7 = tpu.matmul %0, %6, %cst {dimension_numbers = #tpu.dot_dimension_numbers<[1], [0], [0], [1], [0, 0, 1, 1], [], []>} : vector<4x128xf32>, vector<128x512xf32>, vector<4x512xf32> -> vector<4x512xf32>
    %8 = tpu.concatenate %0, %0, %0, %0 in 1 : vector<4x128xf32>, vector<4x128xf32>, vector<4x128xf32>, vector<4x128xf32> -> vector<4x512xf32>
    %9 = arith.subf %7, %8 : vector<4x512xf32>
    %c0_3 = arith.constant 0 : index
    %c0_4 = arith.constant 0 : index
    %10 = vector.load %arg4[%c0_3, %c0_4] : memref<4x4xf32, #tpu.memory_space<vmem>>, vector<4x4xf32>
    %cst_5 = arith.constant dense<0.000000e+00> : vector<4x512xf32>
    %11 = tpu.matmul %10, %9, %cst_5 {dimension_numbers = #tpu.dot_dimension_numbers<[1], [0], [0], [1], [0, 0, 1, 1], [], []>} : vector<4x4xf32>, vector<4x512xf32>, vector<4x512xf32> -> vector<4x512xf32>
    %c0_6 = arith.constant 0 : index
    %c0_7 = arith.constant 0 : index
    %12 = vector.load %arg5[%c0_6, %c0_7] : memref<4x1xf32, #tpu.memory_space<vmem>>, vector<4x1xf32>
    %13 = vector.broadcast %12 : vector<4x1xf32> to vector<4x512xf32>
    %14 = arith.addf %11, %13 : vector<4x512xf32>
    %cst_8 = arith.constant 0.000000e+00 : f32
    %15 = vector.broadcast %cst_8 : f32 to vector<4x512xf32>
    %16 = arith.cmpf oge, %14, %15 : vector<4x512xf32>
    %cst_9 = arith.constant 2.000000e-01 : f32
    %17 = vector.broadcast %cst_9 : f32 to vector<4x512xf32>
    %18 = arith.mulf %17, %14 : vector<4x512xf32>
    %19 = arith.select %16, %14, %18 : vector<4x512xi1>, vector<4x512xf32>
    %c0_10 = arith.constant 0 : index
    %c0_11 = arith.constant 0 : index
    %20 = vector.load %arg6[%c0_10, %c0_11] : memref<384x4xf32, #tpu.memory_space<vmem>>, vector<384x4xf32>
    %cst_12 = arith.constant dense<0.000000e+00> : vector<384x512xf32>
    %21 = tpu.matmul %20, %19, %cst_12 {dimension_numbers = #tpu.dot_dimension_numbers<[1], [0], [0], [1], [0, 0, 1, 1], [], []>} : vector<384x4xf32>, vector<4x512xf32>, vector<384x512xf32> -> vector<384x512xf32>
    %c0_13 = arith.constant 0 : index
    %c0_14 = arith.constant 0 : index
    %22 = vector.load %arg7[%c0_13, %c0_14] : memref<384x1xf32, #tpu.memory_space<vmem>>, vector<384x1xf32>
    %23 = vector.broadcast %22 : vector<384x1xf32> to vector<384x512xf32>
    %24 = arith.addf %21, %23 : vector<384x512xf32>
    %25 = vector.extract_strided_slice %24 {offsets = [0, 0], sizes = [96, 512], strides = [1, 1]} : vector<384x512xf32> to vector<96x512xf32>
    %26 = vector.extract_strided_slice %24 {offsets = [128, 0], sizes = [48, 512], strides = [1, 1]} : vector<384x512xf32> to vector<48x512xf32>
    %27 = vector.extract_strided_slice %24 {offsets = [256, 0], sizes = [12, 512], strides = [1, 1]} : vector<384x512xf32> to vector<12x512xf32>
    %c0_15 = arith.constant 0 : index
    %c0_16 = arith.constant 0 : index
    %28 = vector.load %arg8[%c0_15, %c0_16] : memref<48x4xf32, #tpu.memory_space<vmem>>, vector<48x4xf32>
    %cst_17 = arith.constant dense<0.000000e+00> : vector<48x512xf32>
    %29 = tpu.matmul %28, %9, %cst_17 {dimension_numbers = #tpu.dot_dimension_numbers<[1], [0], [0], [1], [0, 0, 1, 1], [], []>} : vector<48x4xf32>, vector<4x512xf32>, vector<48x512xf32> -> vector<48x512xf32>
    %c0_18 = arith.constant 0 : index
    %c0_19 = arith.constant 0 : index
    %30 = vector.load %arg9[%c0_18, %c0_19] : memref<12x48xf32, #tpu.memory_space<vmem>>, vector<12x48xf32>
    %31 = arith.mulf %29, %26 : vector<48x512xf32>
    %cst_20 = arith.constant dense<0.000000e+00> : vector<12x512xf32>
    %32 = tpu.matmul %30, %31, %cst_20 {dimension_numbers = #tpu.dot_dimension_numbers<[1], [0], [0], [1], [0, 0, 1, 1], [], []>} : vector<12x48xf32>, vector<48x512xf32>, vector<12x512xf32> -> vector<12x512xf32>
    %33 = arith.mulf %27, %32 : vector<12x512xf32>
    %c0_21 = arith.constant 0 : index
    %c0_22 = arith.constant 0 : index
    %34 = vector.load %arg10[%c0_21, %c0_22] : memref<96x12xf32, #tpu.memory_space<vmem>>, vector<96x12xf32>
    %cst_23 = arith.constant dense<0.000000e+00> : vector<96x512xf32>
    %35 = tpu.matmul %34, %33, %cst_23 {dimension_numbers = #tpu.dot_dimension_numbers<[1], [0], [0], [1], [0, 0, 1, 1], [], []>} : vector<96x12xf32>, vector<12x512xf32>, vector<96x512xf32> -> vector<96x512xf32>
    %c0_24 = arith.constant 0 : index
    %c0_25 = arith.constant 0 : index
    %36 = vector.load %arg11[%c0_24, %c0_25] : memref<8x96xf32, #tpu.memory_space<vmem>>, vector<8x96xf32>
    %37 = arith.mulf %25, %35 : vector<96x512xf32>
    %cst_26 = arith.constant dense<0.000000e+00> : vector<8x512xf32>
    %38 = tpu.matmul %36, %37, %cst_26 {dimension_numbers = #tpu.dot_dimension_numbers<[1], [0], [0], [1], [0, 0, 1, 1], [], []>} : vector<8x96xf32>, vector<96x512xf32>, vector<8x512xf32> -> vector<8x512xf32>
    %39 = arith.mulf %9, %9 : vector<4x512xf32>
    %cst_27 = arith.constant dense<0.000000e+00> : vector<512xf32>
    %40 = vector.multi_reduction <add>, %39, %cst_27 [0] : vector<4x512xf32> to vector<512xf32>
    %41 = vector.shape_cast %40 : vector<512xf32> to vector<1x512xf32>
    %cst_28 = arith.constant 0.000000e+00 : f32
    %42 = vector.broadcast %cst_28 : f32 to vector<1x512xf32>
    %43 = arith.subf %42, %41 : vector<1x512xf32>
    %cst_29 = arith.constant 1.000000e-01 : f32
    %44 = vector.broadcast %cst_29 : f32 to vector<1x512xf32>
    %45 = arith.mulf %43, %44 : vector<1x512xf32>
    %46 = math.exp %45 : vector<1x512xf32>
    %47 = vector.broadcast %46 : vector<1x512xf32> to vector<8x512xf32>
    %48 = arith.mulf %38, %47 : vector<8x512xf32>
    %49 = vector.extract_strided_slice %48 {offsets = [0, 0], sizes = [8, 128], strides = [1, 1]} : vector<8x512xf32> to vector<8x128xf32>
    %50 = vector.extract_strided_slice %48 {offsets = [0, 128], sizes = [8, 128], strides = [1, 1]} : vector<8x512xf32> to vector<8x128xf32>
    %51 = arith.addf %49, %50 : vector<8x128xf32>
    %52 = vector.extract_strided_slice %48 {offsets = [0, 256], sizes = [8, 128], strides = [1, 1]} : vector<8x512xf32> to vector<8x128xf32>
    %53 = arith.addf %51, %52 : vector<8x128xf32>
    %54 = vector.extract_strided_slice %48 {offsets = [0, 384], sizes = [8, 128], strides = [1, 1]} : vector<8x512xf32> to vector<8x128xf32>
    %55 = arith.addf %53, %54 : vector<8x128xf32>
    %cst_30 = arith.constant 2.500000e-01 : f32
    %56 = vector.broadcast %cst_30 : f32 to vector<8x128xf32>
    %57 = arith.mulf %55, %56 : vector<8x128xf32>
    %c0_31 = arith.constant 0 : index
    %c0_32 = arith.constant 0 : index
    %58 = vector.load %arg12[%c0_31, %c0_32] : memref<8x36xf32, #tpu.memory_space<vmem>>, vector<8x36xf32>
    %c0_33 = arith.constant 0 : index
    %c0_34 = arith.constant 0 : index
    %59 = vector.load %arg3[%c0_33, %c0_34] : memref<36x128xf32, #tpu.memory_space<vmem>>, vector<36x128xf32>
    %cst_35 = arith.constant dense<0.000000e+00> : vector<8x128xf32>
    %60 = tpu.matmul %58, %59, %cst_35 {dimension_numbers = #tpu.dot_dimension_numbers<[1], [0], [0], [1], [0, 0, 1, 1], [], []>} : vector<8x36xf32>, vector<36x128xf32>, vector<8x128xf32> -> vector<8x128xf32>
    %61 = arith.addf %57, %60 : vector<8x128xf32>
    %cst_36 = arith.constant 5.000000e-01 : f32
    %62 = vector.broadcast %cst_36 : f32 to vector<8x128xf32>
    %63 = arith.mulf %61, %62 : vector<8x128xf32>
    %c0_37 = arith.constant 0 : index
    %c0_38 = arith.constant 0 : index
    %64 = vector.load %arg13[%c0_37, %c0_38] : memref<8x1xf32, #tpu.memory_space<vmem>>, vector<8x1xf32>
    %65 = vector.broadcast %64 : vector<8x1xf32> to vector<8x128xf32>
    %66 = arith.addf %63, %65 : vector<8x128xf32>
    %c0_39 = arith.constant 0 : index
    %c0_40 = arith.constant 0 : index
    %67 = vector.load %arg14[%c0_39, %c0_40] : memref<8x128xf32, #tpu.memory_space<vmem>>, vector<8x128xf32>
    tpu.vector_store %arg14[%c0_39, %c0_40], %66 {strides = array<i32>} : memref<8x128xf32, #tpu.memory_space<vmem>>, vector<8x128xf32>,
    return
  }
  func.func @transform_0(%arg0: i32) -> (i32, i32) {
    %c0_i32 = arith.constant 0 : i32
    %c0_i32_0 = arith.constant 0 : i32
    %c0_i32_1 = arith.constant 0 : i32
    return %c0_i32, %c0_i32_0 : i32, i32
  }
  func.func @transform_1(%arg0: i32) -> (i32, i32) {
    %c0_i32 = arith.constant 0 : i32
    %c0_i32_0 = arith.constant 0 : i32
    %c0_i32_1 = arith.constant 0 : i32
    return %c0_i32, %c0_i32_0 : i32, i32
  }
  func.func @transform_2(%arg0: i32) -> (i32, i32) {
    %c0_i32 = arith.constant 0 : i32
    %c0_i32_0 = arith.constant 0 : i32
    %c0_i32_1 = arith.constant 0 : i32
    return %c0_i32, %c0_i32_0 : i32, i32
  }
  func.func @transform_3(%arg0: i32) -> (i32, i32) {
    %c0_i32 = arith.constant 0 : i32
    %c0_i32_0 = arith.constant 0 : i32
    %c0_i32_1 = arith.constant 0 : i32
    return %c0_i32, %c0_i32_0 : i32, i32
  }
  func.func @transform_4(%arg0: i32) -> (i32, i32) {
    %c0_i32 = arith.constant 0 : i32
    %c0_i32_0 = arith.constant 0 : i32
    %c0_i32_1 = arith.constant 0 : i32
    return %c0_i32, %c0_i32_0 : i32, i32
  }
  func.func @transform_5(%arg0: i32) -> (i32, i32) {
    %c0_i32 = arith.constant 0 : i32
    %c0_i32_0 = arith.constant 0 : i32
    %c0_i32_1 = arith.constant 0 : i32
    return %c0_i32, %c0_i32_0 : i32, i32
  }
  func.func @transform_6(%arg0: i32) -> (i32, i32) {
    %c0_i32 = arith.constant 0 : i32
    %c0_i32_0 = arith.constant 0 : i32
    %c0_i32_1 = arith.constant 0 : i32
    return %c0_i32, %c0_i32_0 : i32, i32
  }
  func.func @transform_7(%arg0: i32) -> (i32, i32) {
    %c0_i32 = arith.constant 0 : i32
    %c0_i32_0 = arith.constant 0 : i32
    %c0_i32_1 = arith.constant 0 : i32
    return %c0_i32, %c0_i32_0 : i32, i32
  }
  func.func @transform_8(%arg0: i32) -> (i32, i32) {
    %c0_i32 = arith.constant 0 : i32
    %c0_i32_0 = arith.constant 0 : i32
    %c0_i32_1 = arith.constant 0 : i32
    return %c0_i32, %c0_i32_0 : i32, i32
  }
  func.func @transform_9(%arg0: i32) -> (i32, i32) {
    %c0_i32 = arith.constant 0 : i32
    %c0_i32_0 = arith.constant 0 : i32
    %c0_i32_1 = arith.constant 0 : i32
    return %c0_i32, %c0_i32_0 : i32, i32
  }
  func.func @transform_10(%arg0: i32) -> (i32, i32) {
    %c0_i32 = arith.constant 0 : i32
    %c0_i32_0 = arith.constant 0 : i32
    %c0_i32_1 = arith.constant 0 : i32
    return %c0_i32, %c0_i32_0 : i32, i32
  }
  func.func @transform_11(%arg0: i32) -> (i32, i32) {
    %c0_i32 = arith.constant 0 : i32
    %c0_i32_0 = arith.constant 0 : i32
    %c0_i32_1 = arith.constant 0 : i32
    return %c0_i32, %c0_i32_0 : i32, i32
  }
  func.func @transform_12(%arg0: i32) -> (i32, i32) {
    %c0_i32 = arith.constant 0 : i32
    %c0_i32_0 = arith.constant 0 : i32
    %c0_i32_1 = arith.constant 0 : i32
    return %c0_i32, %c0_i32_0 : i32, i32
  }
  func.func @transform_13(%arg0: i32) -> (i32, i32) {
    %c0_i32 = arith.constant 0 : i32
    %c0_i32_0 = arith.constant 0 : i32
    %c0_i32_1 = arith.constant 0 : i32
    return %c0_i32, %c0_i32_0 : i32, i32
  }
}

</mosaic_0001>

<llo_original>
// kernel: _lambda_.1
$region0: #{_lambda_.1}
  #allocation0 [shape = 'u32[]', space=smem, size = 0x4, offset = 0x4, fixed_abs, tag = 'smem constant byte address 0x4 - core index']
  #allocation1 [shape = 'u32[144,128]{1,0:T(1,128)}', space=vmem, size = 0x12000, scoped, tag = 'internal scratch']
  %s0 = inlined_call_operand.vmem [shape: s32[1,512], index: 0, kind: input, shape index: {}]
  %s1 = inlined_call_operand.vmem [shape: f32[4,128], index: 1, kind: input, shape index: {}]
  %s2 = inlined_call_operand.vmem [shape: f32[36,128], index: 2, kind: input, shape index: {}]
  %s3 = inlined_call_operand.vmem [shape: f32[4,4], index: 3, kind: input, shape index: {}]
  %s4 = inlined_call_operand.vmem [shape: f32[4,1], index: 4, kind: input, shape index: {}]
  %s5 = inlined_call_operand.vmem [shape: f32[384,4], index: 5, kind: input, shape index: {}]
  %s6 = inlined_call_operand.vmem [shape: f32[384,1], index: 6, kind: input, shape index: {}]
  %s7 = inlined_call_operand.vmem [shape: f32[48,4], index: 7, kind: input, shape index: {}]
  %s8 = inlined_call_operand.vmem [shape: f32[12,48], index: 8, kind: input, shape index: {}]
  %s9 = inlined_call_operand.vmem [shape: f32[96,12], index: 9, kind: input, shape index: {}]
  %s10 = inlined_call_operand.vmem [shape: f32[8,96], index: 10, kind: input, shape index: {}]
  %s11 = inlined_call_operand.vmem [shape: f32[8,36], index: 11, kind: input, shape index: {}]
  %s12 = inlined_call_operand.vmem [shape: f32[8,1], index: 12, kind: input, shape index: {}]
  %s13 = inlined_call_operand.vmem [shape: f32[8,128], index: 13, kind: output, shape index: {}]
  %s14 = sld [smem:[#allocation0]]
  $region62: #{_lambda_.1} parent=0
    _
  %s16 = ssub.s32 1, %s14
  %s17 = scalar_select 0, %s16, %s14
  // Predicated region
  $region2: #{_lambda_.1} parent=0 // pred_check
    _
  $region3: #{_lambda_.1} parent=0 // pred_check_branch
    %19 = sbr.rel (0) target = $region5
  $region4: #{_lambda_.1} parent=0 // pred_region
    _
  $region5: #{_lambda_.1} parent=0 // pred_fallthru
    _
  // Predicated region
  $region6: #{_lambda_.1} parent=0 // pred_check
    _
  $region7: #{_lambda_.1} parent=0 // pred_check_branch
    %21 = sbr.rel (0) target = $region9
  $region8: #{_lambda_.1} parent=0 // pred_region
    _
  $region9: #{_lambda_.1} parent=0 // pred_fallthru
    _
  // Predicated region
  $region10: #{_lambda_.1} parent=0 // pred_check
    _
  $region11: #{_lambda_.1} parent=0 // pred_check_branch
    %23 = sbr.rel (0) target = $region13
  $region12: #{_lambda_.1} parent=0 // pred_region
    _
  $region13: #{_lambda_.1} parent=0 // pred_fallthru
    _
  // Predicated region
  $region14: #{_lambda_.1} parent=0 // pred_check
    _
  $region15: #{_lambda_.1} parent=0 // pred_check_branch
    %25 = sbr.rel (0) target = $region17
  $region16: #{_lambda_.1} parent=0 // pred_region
    _
  $region17: #{_lambda_.1} parent=0 // pred_fallthru
    _
  // Predicated region
  $region18: #{_lambda_.1} parent=0 // pred_check
    _
  $region19: #{_lambda_.1} parent=0 // pred_check_branch
    %27 = sbr.rel (0) target = $region21
  $region20: #{_lambda_.1} parent=0 // pred_region
    _
  $region21: #{_lambda_.1} parent=0 // pred_fallthru
    _
  // Predicated region
  $region22: #{_lambda_.1} parent=0 // pred_check
    _
  $region23: #{_lambda_.1} parent=0 // pred_check_branch
    %29 = sbr.rel (0) target = $region25
  $region24: #{_lambda_.1} parent=0 // pred_region
    _
  $region25: #{_lambda_.1} parent=0 // pred_fallthru
    _
  // Predicated region
  $region26: #{_lambda_.1} parent=0 // pred_check
    _
  $region27: #{_lambda_.1} parent=0 // pred_check_branch
    %31 = sbr.rel (0) target = $region29
  $region28: #{_lambda_.1} parent=0 // pred_region
    _
  $region29: #{_lambda_.1} parent=0 // pred_fallthru
    _
  // Predicated region
  $region30: #{_lambda_.1} parent=0 // pred_check
    _
  $region31: #{_lambda_.1} parent=0 // pred_check_branch
    %33 = sbr.rel (0) target = $region33
  $region32: #{_lambda_.1} parent=0 // pred_region
    _
  $region33: #{_lambda_.1} parent=0 // pred_fallthru
    _
  // Predicated region
  $region34: #{_lambda_.1} parent=0 // pred_check
    _
  $region35: #{_lambda_.1} parent=0 // pred_check_branch
    %35 = sbr.rel (0) target = $region37
  $region36: #{_lambda_.1} parent=0 // pred_region
    _
  $region37: #{_lambda_.1} parent=0 // pred_fallthru
    _
  // Predicated region
  $region38: #{_lambda_.1} parent=0 // pred_check
    _
  $region39: #{_lambda_.1} parent=0 // pred_check_branch
    %37 = sbr.rel (0) target = $region41
  $region40: #{_lambda_.1} parent=0 // pred_region
    _
  $region41: #{_lambda_.1} parent=0 // pred_fallthru
    _
  // Predicated region
  $region42: #{_lambda_.1} parent=0 // pred_check
    _
  $region43: #{_lambda_.1} parent=0 // pred_check_branch
    %39 = sbr.rel (0) target = $region45
  $region44: #{_lambda_.1} parent=0 // pred_region
    _
  $region45: #{_lambda_.1} parent=0 // pred_fallthru
    _
  // Predicated region
  $region46: #{_lambda_.1} parent=0 // pred_check
    _
  $region47: #{_lambda_.1} parent=0 // pred_check_branch
    %41 = sbr.rel (0) target = $region49
  $region48: #{_lambda_.1} parent=0 // pred_region
    _
  $region49: #{_lambda_.1} parent=0 // pred_fallthru
    _
  // Predicated region
  $region50: #{_lambda_.1} parent=0 // pred_check
    _
  $region51: #{_lambda_.1} parent=0 // pred_check_branch
    %43 = sbr.rel (0) target = $region53
  $region52: #{_lambda_.1} parent=0 // pred_region
    _
  $region53: #{_lambda_.1} parent=0 // pred_fallthru
    _
  %v44 = vld [vmem:[%s1] sm:$0xf]
  %v45 = vlaneseq
  %v46 = vshrl.u32 %v45, 7
  %v47 = vadd.s32 %v46, 8
  %v48 = vadd.s32 %v46, 16
  %v49 = vadd.s32 %v46, 24
  %v50 = vadd.s32 %v46, 32
  %v51 = vadd.s32 %v46, 40
  %v52 = vadd.s32 %v46, 48
  %v53 = vadd.s32 %v46, 56
  %v54 = vadd.s32 %v46, 64
  %v55 = vadd.s32 %v46, 72
  %v56 = vadd.s32 %v46, 80
  %v57 = vadd.s32 %v46, 88
  %v58 = vadd.s32 %v46, 96
  %v59 = vadd.s32 %v46, 104
  %v60 = vadd.s32 %v46, 112
  %v61 = vadd.s32 %v46, 120
  %v62 = vld [vmem:[%s0] sm:$0xf]
  %v63 = vlaneseq
  %v64 = vshrl.u32 %v63, 7
  %v65 = vsub.s32 0, %v64
  %v66 = vrot.slane %v62, %v65
  %v67 = vlaneseq
  %v68 = vshrl.u32 %v67, 7
  %v69 = vsub.s32 1, %v68
  %v70 = vrot.slane %v62, %v69
  %v71 = vlaneseq
  %v72 = vshrl.u32 %v71, 7
  %v73 = vsub.s32 2, %v72
  %v74 = vrot.slane %v62, %v73
  %v75 = vlaneseq
  %v76 = vshrl.u32 %v75, 7
  %v77 = vsub.s32 3, %v76
  %v78 = vrot.slane %v62, %v77
  %vm79 = vcmp.eq.s32.totalorder %v46, %v66
  %vm80 = vcmp.eq.s32.totalorder %v46, %v70
  %vm81 = vcmp.eq.s32.totalorder %v46, %v74
  %vm82 = vcmp.eq.s32.totalorder %v46, %v78
  %vm83 = vcmp.eq.s32.totalorder %v47, %v66
  %vm84 = vcmp.eq.s32.totalorder %v47, %v70
  %vm85 = vcmp.eq.s32.totalorder %v47, %v74
  %vm86 = vcmp.eq.s32.totalorder %v47, %v78
  %vm87 = vcmp.eq.s32.totalorder %v48, %v66
  %vm88 = vcmp.eq.s32.totalorder %v48, %v70
  %vm89 = vcmp.eq.s32.totalorder %v48, %v74
  %vm90 = vcmp.eq.s32.totalorder %v48, %v78
  %vm91 = vcmp.eq.s32.totalorder %v49, %v66
  %vm92 = vcmp.eq.s32.totalorder %v49, %v70
  %vm93 = vcmp.eq.s32.totalorder %v49, %v74
  %vm94 = vcmp.eq.s32.totalorder %v49, %v78
  %vm95 = vcmp.eq.s32.totalorder %v50, %v66
  %vm96 = vcmp.eq.s32.totalorder %v50, %v70
  %vm97 = vcmp.eq.s32.totalorder %v50, %v74
  %vm98 = vcmp.eq.s32.totalorder %v50, %v78
  %vm99 = vcmp.eq.s32.totalorder %v51, %v66
  %vm100 = vcmp.eq.s32.totalorder %v51, %v70
  %vm101 = vcmp.eq.s32.totalorder %v51, %v74
  %vm102 = vcmp.eq.s32.totalorder %v51, %v78
  %vm103 = vcmp.eq.s32.totalorder %v52, %v66
  %vm104 = vcmp.eq.s32.totalorder %v52, %v70
  %vm105 = vcmp.eq.s32.totalorder %v52, %v74
  %vm106 = vcmp.eq.s32.totalorder %v52, %v78
  %vm107 = vcmp.eq.s32.totalorder %v53, %v66
  %vm108 = vcmp.eq.s32.totalorder %v53, %v70
  %vm109 = vcmp.eq.s32.totalorder %v53, %v74
  %vm110 = vcmp.eq.s32.totalorder %v53, %v78
  %vm111 = vcmp.eq.s32.totalorder %v54, %v66
  %vm112 = vcmp.eq.s32.totalorder %v54, %v70
  %vm113 = vcmp.eq.s32.totalorder %v54, %v74
  %vm114 = vcmp.eq.s32.totalorder %v54, %v78
  %vm115 = vcmp.eq.s32.totalorder %v55, %v66
  %vm116 = vcmp.eq.s32.totalorder %v55, %v70
  %vm117 = vcmp.eq.s32.totalorder %v55, %v74
  %vm118 = vcmp.eq.s32.totalorder %v55, %v78
  %vm119 = vcmp.eq.s32.totalorder %v56, %v66
  %vm120 = vcmp.eq.s32.totalorder %v56, %v70
  %vm121 = vcmp.eq.s32.totalorder %v56, %v74
  %vm122 = vcmp.eq.s32.totalorder %v56, %v78
  %vm123 = vcmp.eq.s32.totalorder %v57, %v66
  %vm124 = vcmp.eq.s32.totalorder %v57, %v70
  %vm125 = vcmp.eq.s32.totalorder %v57, %v74
  %vm126 = vcmp.eq.s32.totalorder %v57, %v78
  %vm127 = vcmp.eq.s32.totalorder %v58, %v66
  %vm128 = vcmp.eq.s32.totalorder %v58, %v70
  %vm129 = vcmp.eq.s32.totalorder %v58, %v74
  %vm130 = vcmp.eq.s32.totalorder %v58, %v78
  %vm131 = vcmp.eq.s32.totalorder %v59, %v66
  %vm132 = vcmp.eq.s32.totalorder %v59, %v70
  %vm133 = vcmp.eq.s32.totalorder %v59, %v74
  %vm134 = vcmp.eq.s32.totalorder %v59, %v78
  %vm135 = vcmp.eq.s32.totalorder %v60, %v66
  %vm136 = vcmp.eq.s32.totalorder %v60, %v70
  %vm137 = vcmp.eq.s32.totalorder %v60, %v74
  %vm138 = vcmp.eq.s32.totalorder %v60, %v78
  %vm139 = vcmp.eq.s32.totalorder %v61, %v66
  %vm140 = vcmp.eq.s32.totalorder %v61, %v70
  %vm141 = vcmp.eq.s32.totalorder %v61, %v74
  %vm142 = vcmp.eq.s32.totalorder %v61, %v78
  %v143 = vsel %vm79, 1, 0
  %v144 = vsel %vm80, 1, 0
  %v145 = vsel %vm81, 1, 0
  %v146 = vsel %vm82, 1, 0
  %v147 = vsel %vm83, 1, 0
  %v148 = vsel %vm84, 1, 0
  %v149 = vsel %vm85, 1, 0
  %v150 = vsel %vm86, 1, 0
  %v151 = vsel %vm87, 1, 0
  %v152 = vsel %vm88, 1, 0
  %v153 = vsel %vm89, 1, 0
  %v154 = vsel %vm90, 1, 0
  %v155 = vsel %vm91, 1, 0
  %v156 = vsel %vm92, 1, 0
  %v157 = vsel %vm93, 1, 0
  %v158 = vsel %vm94, 1, 0
  %v159 = vsel %vm95, 1, 0
  %v160 = vsel %vm96, 1, 0
  %v161 = vsel %vm97, 1, 0
  %v162 = vsel %vm98, 1, 0
  %v163 = vsel %vm99, 1, 0
  %v164 = vsel %vm100, 1, 0
  %v165 = vsel %vm101, 1, 0
  %v166 = vsel %vm102, 1, 0
  %v167 = vsel %vm103, 1, 0
  %v168 = vsel %vm104, 1, 0
  %v169 = vsel %vm105, 1, 0
  %v170 = vsel %vm106, 1, 0
  %v171 = vsel %vm107, 1, 0
  %v172 = vsel %vm108, 1, 0
  %v173 = vsel %vm109, 1, 0
  %v174 = vsel %vm110, 1, 0
  %v175 = vsel %vm111, 1, 0
  %v176 = vsel %vm112, 1, 0
  %v177 = vsel %vm113, 1, 0
  %v178 = vsel %vm114, 1, 0
  %v179 = vsel %vm115, 1, 0
  %v180 = vsel %vm116, 1, 0
  %v181 = vsel %vm117, 1, 0
  %v182 = vsel %vm118, 1, 0
  %v183 = vsel %vm119, 1, 0
  %v184 = vsel %vm120, 1, 0
  %v185 = vsel %vm121, 1, 0
  %v186 = vsel %vm122, 1, 0
  %v187 = vsel %vm123, 1, 0
  %v188 = vsel %vm124, 1, 0
  %v189 = vsel %vm125, 1, 0
  %v190 = vsel %vm126, 1, 0
  %v191 = vsel %vm127, 1, 0
  %v192 = vsel %vm128, 1, 0
  %v193 = vsel %vm129, 1, 0
  %v194 = vsel %vm130, 1, 0
  %v195 = vsel %vm131, 1, 0
  %v196 = vsel %vm132, 1, 0
  %v197 = vsel %vm133, 1, 0
  %v198 = vsel %vm134, 1, 0
  %v199 = vsel %vm135, 1, 0
  %v200 = vsel %vm136, 1, 0
  %v201 = vsel %vm137, 1, 0
  %v202 = vsel %vm138, 1, 0
  %v203 = vsel %vm139, 1, 0
  %v204 = vsel %vm140, 1, 0
  %v205 = vsel %vm141, 1, 0
  %v206 = vsel %vm142, 1, 0
  %v207 = vcvt.s32.f32 %v143
  %v208 = vcvt.s32.f32 %v144
  %v209 = vcvt.s32.f32 %v145
  %v210 = vcvt.s32.f32 %v146
  %v211 = vcvt.s32.f32 %v147
  %v212 = vcvt.s32.f32 %v148
  %v213 = vcvt.s32.f32 %v149
  %v214 = vcvt.s32.f32 %v150
  %v215 = vcvt.s32.f32 %v151
  %v216 = vcvt.s32.f32 %v152
  %v217 = vcvt.s32.f32 %v153
  %v218 = vcvt.s32.f32 %v154
  %v219 = vcvt.s32.f32 %v155
  %v220 = vcvt.s32.f32 %v156
  %v221 = vcvt.s32.f32 %v157
  %v222 = vcvt.s32.f32 %v158
  %v223 = vcvt.s32.f32 %v159
  %v224 = vcvt.s32.f32 %v160
  %v225 = vcvt.s32.f32 %v161
  %v226 = vcvt.s32.f32 %v162
  %v227 = vcvt.s32.f32 %v163
  %v228 = vcvt.s32.f32 %v164
  %v229 = vcvt.s32.f32 %v165
  %v230 = vcvt.s32.f32 %v166
  %v231 = vcvt.s32.f32 %v167
  %v232 = vcvt.s32.f32 %v168
  %v233 = vcvt.s32.f32 %v169
  %v234 = vcvt.s32.f32 %v170
  %v235 = vcvt.s32.f32 %v171
  %v236 = vcvt.s32.f32 %v172
  %v237 = vcvt.s32.f32 %v173
  %v238 = vcvt.s32.f32 %v174
  %v239 = vcvt.s32.f32 %v175
  %v240 = vcvt.s32.f32 %v176
  %v241 = vcvt.s32.f32 %v177
  %v242 = vcvt.s32.f32 %v178
  %v243 = vcvt.s32.f32 %v179
  %v244 = vcvt.s32.f32 %v180
  %v245 = vcvt.s32.f32 %v181
  %v246 = vcvt.s32.f32 %v182
  %v247 = vcvt.s32.f32 %v183
  %v248 = vcvt.s32.f32 %v184
  %v249 = vcvt.s32.f32 %v185
  %v250 = vcvt.s32.f32 %v186
  %v251 = vcvt.s32.f32 %v187
  %v252 = vcvt.s32.f32 %v188
  %v253 = vcvt.s32.f32 %v189
  %v254 = vcvt.s32.f32 %v190
  %v255 = vcvt.s32.f32 %v191
  %v256 = vcvt.s32.f32 %v192
  %v257 = vcvt.s32.f32 %v193
  %v258 = vcvt.s32.f32 %v194
  %v259 = vcvt.s32.f32 %v195
  %v260 = vcvt.s32.f32 %v196
  %v261 = vcvt.s32.f32 %v197
  %v262 = vcvt.s32.f32 %v198
  %v263 = vcvt.s32.f32 %v199
  %v264 = vcvt.s32.f32 %v200
  %v265 = vcvt.s32.f32 %v201
  %v266 = vcvt.s32.f32 %v202
  %v267 = vcvt.s32.f32 %v203
  %v268 = vcvt.s32.f32 %v204
  %v269 = vcvt.s32.f32 %v205
  %v270 = vcvt.s32.f32 %v206
  %271 = vmatprep.subr.mxu0 %v208
  %272 = vmatpush1.msra.mxu0 %v207
  %273 = vmatprep.subr.mxu0 %v212
  %274 = vmatpush1.msra.mxu0 %v211
  %275 = vmatprep.subr.mxu0 %v216
  %276 = vmatpush1.msra.mxu0 %v215
  %277 = vmatprep.subr.mxu0 %v220
  %278 = vmatpush1.msra.mxu0 %v219
  %279 = vmatprep.subr.mxu0 %v224
  %280 = vmatpush1.msra.mxu0 %v223
  %281 = vmatprep.subr.mxu0 %v228
  %282 = vmatpush1.msra.mxu0 %v227
  %283 = vmatprep.subr.mxu0 %v232
  %284 = vmatpush1.msra.mxu0 %v231
  %285 = vmatprep.subr.mxu0 %v236
  %286 = vmatpush1.msra.mxu0 %v235
  %287 = vmatprep.subr.mxu0 %v240
  %288 = vmatpush1.msra.mxu0 %v239
  %289 = vmatprep.subr.mxu0 %v244
  %290 = vmatpush1.msra.mxu0 %v243
  %291 = vmatprep.subr.mxu0 %v248
  %292 = vmatpush1.msra.mxu0 %v247
  %293 = vmatprep.subr.mxu0 %v252
  %294 = vmatpush1.msra.mxu0 %v251
  %295 = vmatprep.subr.mxu0 %v256
  %296 = vmatpush1.msra.mxu0 %v255
  %297 = vmatprep.subr.mxu0 %v260
  %298 = vmatpush1.msra.mxu0 %v259
  %299 = vmatprep.subr.mxu0 %v264
  %300 = vmatpush1.msra.mxu0 %v263
  %301 = vmatprep.subr.mxu0 %v268
  %302 = vmatpush1.msra.mxu0 %v267
  %303 = vmatprep.subr.mxu0 0.0
  %304 = vmatpush1.msra.mxu0 0.0
  %305 = vmatprep.subr.mxu0 0.0
  %306 = vmatpush1.msra.mxu0 0.0
  %307 = vmatprep.subr.mxu0 0.0
  %308 = vmatpush1.msra.mxu0 0.0
  %309 = vmatprep.subr.mxu0 0.0
  %310 = vmatpush1.msra.mxu0 0.0
  %311 = vmatprep.subr.mxu0 0.0
  %312 = vmatpush1.msra.mxu0 0.0
  %313 = vmatprep.subr.mxu0 0.0
  %314 = vmatpush1.msra.mxu0 0.0
  %315 = vmatprep.subr.mxu0 0.0
  %316 = vmatpush1.msra.mxu0 0.0
  %317 = vmatprep.subr.mxu0 0.0
  %318 = vmatpush1.msra.mxu0 0.0
  %319 = vmatprep.subr.mxu0 0.0
  %320 = vmatpush1.msra.mxu0 0.0
  %321 = vmatprep.subr.mxu0 0.0
  %322 = vmatpush1.msra.mxu0 0.0
  %323 = vmatprep.subr.mxu0 0.0
  %324 = vmatpush1.msra.mxu0 0.0
  %325 = vmatprep.subr.mxu0 0.0
  %326 = vmatpush1.msra.mxu0 0.0
  %327 = vmatprep.subr.mxu0 0.0
  %328 = vmatpush1.msra.mxu0 0.0
  %329 = vmatprep.subr.mxu0 0.0
  %330 = vmatpush1.msra.mxu0 0.0
  %331 = vmatprep.subr.mxu0 0.0
  %332 = vmatpush1.msra.mxu0 0.0
  %333 = vmatprep.subr.mxu0 0.0
  %334 = vmatpush1.msra.mxu0 0.0
  %335 = vmatprep.mubr.f32.mxu0 0.0
  %336 = vmatmul.mubr.f32.gmra.mrb[0].mxu0 %v44
  %v337 = vpop.f32.mrb[0].mxu0
  %v338 = vadd.f32 0.0, %v337
  %v339 = vpop.f32.mrb[0].mxu0
  %v340 = vadd.f32 0.0, %v339
  %341 = vdwg.mxu0
  %342 = vmatprep.subr.mxu0 %v210
  %343 = vmatpush1.msra.mxu0 %v209
  %344 = vmatprep.subr.mxu0 %v214
  %345 = vmatpush1.msra.mxu0 %v213
  %346 = vmatprep.subr.mxu0 %v218
  %347 = vmatpush1.msra.mxu0 %v217
  %348 = vmatprep.subr.mxu0 %v222
  %349 = vmatpush1.msra.mxu0 %v221
  %350 = vmatprep.subr.mxu0 %v226
  %351 = vmatpush1.msra.mxu0 %v225
  %352 = vmatprep.subr.mxu0 %v230
  %353 = vmatpush1.msra.mxu0 %v229
  %354 = vmatprep.subr.mxu0 %v234
  %355 = vmatpush1.msra.mxu0 %v233
  %356 = vmatprep.subr.mxu0 %v238
  %357 = vmatpush1.msra.mxu0 %v237
  %358 = vmatprep.subr.mxu0 %v242
  %359 = vmatpush1.msra.mxu0 %v241
  %360 = vmatprep.subr.mxu0 %v246
  %361 = vmatpush1.msra.mxu0 %v245
  %362 = vmatprep.subr.mxu0 %v250
  %363 = vmatpush1.msra.mxu0 %v249
  %364 = vmatprep.subr.mxu0 %v254
  %365 = vmatpush1.msra.mxu0 %v253
  %366 = vmatprep.subr.mxu0 %v258
  %367 = vmatpush1.msra.mxu0 %v257
  %368 = vmatprep.subr.mxu0 %v262
  %369 = vmatpush1.msra.mxu0 %v261
  %370 = vmatprep.subr.mxu0 %v266
  %371 = vmatpush1.msra.mxu0 %v265
  %372 = vmatprep.subr.mxu0 %v270
  %373 = vmatpush1.msra.mxu0 %v269
  %374 = vmatprep.subr.mxu0 0.0
  %375 = vmatpush1.msra.mxu0 0.0
  %376 = vmatprep.subr.mxu0 0.0
  %377 = vmatpush1.msra.mxu0 0.0
  %378 = vmatprep.subr.mxu0 0.0
  %379 = vmatpush1.msra.mxu0 0.0
  %380 = vmatprep.subr.mxu0 0.0
  %381 = vmatpush1.msra.mxu0 0.0
  %382 = vmatprep.subr.mxu0 0.0
  %383 = vmatpush1.msra.mxu0 0.0
  %384 = vmatprep.subr.mxu0 0.0
  %385 = vmatpush1.msra.mxu0 0.0
  %386 = vmatprep.subr.mxu0 0.0
  %387 = vmatpush1.msra.mxu0 0.0
  %388 = vmatprep.subr.mxu0 0.0
  %389 = vmatpush1.msra.mxu0 0.0
  %390 = vmatprep.subr.mxu0 0.0
  %391 = vmatpush1.msra.mxu0 0.0
  %392 = vmatprep.subr.mxu0 0.0
  %393 = vmatpush1.msra.mxu0 0.0
  %394 = vmatprep.subr.mxu0 0.0
  %395 = vmatpush1.msra.mxu0 0.0
  %396 = vmatprep.subr.mxu0 0.0
  %397 = vmatpush1.msra.mxu0 0.0
  %398 = vmatprep.subr.mxu0 0.0
  %399 = vmatpush1.msra.mxu0 0.0
  %400 = vmatprep.subr.mxu0 0.0
  %401 = vmatpush1.msra.mxu0 0.0
  %402 = vmatprep.subr.mxu0 0.0
  %403 = vmatpush1.msra.mxu0 0.0
  %404 = vmatprep.subr.mxu0 0.0
  %405 = vmatpush1.msra.mxu0 0.0
  %406 = vmatprep.mubr.f32.mxu0 0.0
  %407 = vmatmul.mubr.f32.gmra.mrb[0].mxu0 %v44
  %v408 = vpop.f32.mrb[0].mxu0
  %v409 = vadd.f32 0.0, %v408
  %v410 = vpop.f32.mrb[0].mxu0
  %v411 = vadd.f32 0.0, %v410
  %412 = vdwg.mxu0
  %v413 = vsub.f32 %v338, %v44
  %v414 = vsub.f32 %v340, %v44
  %v415 = vsub.f32 %v409, %v44
  %v416 = vsub.f32 %v411, %v44
  %v417 = vld [vmem:[%s3] sm:$0xf]
  %v418 = vld [vmem:[%s4] sm:$0xf]
  %420 = vset.pattern.permute.xlu0 0
  %421 = vperm.xlu0 %420, %v418
  %v422 = vpop.permute.xlu0 %421
  %vm424 = vcmask 31744
  %v426 = vsel %vm424, %v417, 0
  %vm428 = vcmask 1043456
  %v430 = vsel %vm428, %v413, 0
  %v433 = vsel %vm428, %v414, 0
  %v436 = vsel %vm428, %v415, 0
  %v439 = vsel %vm428, %v416, 0
  %441 = vmatprep.subr.mxu0 %v433
  %442 = vmatpush1.msra.mxu0 %v430
  %443 = vmatprep.subr.mxu0 0.0
  %444 = vmatpush1.msra.mxu0 0.0
  %445 = vmatprep.subr.mxu0 0.0
  %446 = vmatpush1.msra.mxu0 0.0
  %447 = vmatprep.subr.mxu0 0.0
  %448 = vmatpush1.msra.mxu0 0.0
  %449 = vmatprep.subr.mxu0 0.0
  %450 = vmatpush1.msra.mxu0 0.0
  %451 = vmatprep.subr.mxu0 0.0
  %452 = vmatpush1.msra.mxu0 0.0
  %453 = vmatprep.subr.mxu0 0.0
  %454 = vmatpush1.msra.mxu0 0.0
  %455 = vmatprep.subr.mxu0 0.0
  %456 = vmatpush1.msra.mxu0 0.0
  %457 = vmatprep.subr.mxu0 0.0
  %458 = vmatpush1.msra.mxu0 0.0
  %459 = vmatprep.subr.mxu0 0.0
  %460 = vmatpush1.msra.mxu0 0.0
  %461 = vmatprep.subr.mxu0 0.0
  %462 = vmatpush1.msra.mxu0 0.0
  %463 = vmatprep.subr.mxu0 0.0
  %464 = vmatpush1.msra.mxu0 0.0
  %465 = vmatprep.subr.mxu0 0.0
  %466 = vmatpush1.msra.mxu0 0.0
  %467 = vmatprep.subr.mxu0 0.0
  %468 = vmatpush1.msra.mxu0 0.0
  %469 = vmatprep.subr.mxu0 0.0
  %470 = vmatpush1.msra.mxu0 0.0
  %471 = vmatprep.subr.mxu0 0.0
  %472 = vmatpush1.msra.mxu0 0.0
  %473 = vmatprep.subr.mxu0 0.0
  %474 = vmatpush1.msra.mxu0 0.0
  %475 = vmatprep.subr.mxu0 0.0
  %476 = vmatpush1.msra.mxu0 0.0
  %477 = vmatprep.subr.mxu0 0.0
  %478 = vmatpush1.msra.mxu0 0.0
  %479 = vmatprep.subr.mxu0 0.0
  %480 = vmatpush1.msra.mxu0 0.0
  %481 = vmatprep.subr.mxu0 0.0
  %482 = vmatpush1.msra.mxu0 0.0
  %483 = vmatprep.subr.mxu0 0.0
  %484 = vmatpush1.msra.mxu0 0.0
  %485 = vmatprep.subr.mxu0 0.0
  %486 = vmatpush1.msra.mxu0 0.0
  %487 = vmatprep.subr.mxu0 0.0
  %488 = vmatpush1.msra.mxu0 0.0
  %489 = vmatprep.subr.mxu0 0.0
  %490 = vmatpush1.msra.mxu0 0.0
  %491 = vmatprep.subr.mxu0 0.0
  %492 = vmatpush1.msra.mxu0 0.0
  %493 = vmatprep.subr.mxu0 0.0
  %494 = vmatpush1.msra.mxu0 0.0
  %495 = vmatprep.subr.mxu0 0.0
  %496 = vmatpush1.msra.mxu0 0.0
  %497 = vmatprep.subr.mxu0 0.0
  %498 = vmatpush1.msra.mxu0 0.0
  %499 = vmatprep.subr.mxu0 0.0
  %500 = vmatpush1.msra.mxu0 0.0
  %501 = vmatprep.subr.mxu0 0.0
  %502 = vmatpush1.msra.mxu0 0.0
  %503 = vmatprep.subr.mxu0 0.0
  %504 = vmatpush1.msra.mxu0 0.0
  %505 = vmatprep.mubr.f32.mxu0 0.0
  %506 = vmatmul.mubr.f32.gmra.mrb[0].mxu0 %v426
  %v507 = vpop.f32.mrb[0].mxu0
  %v508 = vadd.f32 %v422, %v507
  %v509 = vpop.f32.mrb[0].mxu0
  %v510 = vadd.f32 %v422, %v509
  %511 = vdwg.mxu0
  %512 = vmatprep.subr.mxu0 %v439
  %513 = vmatpush1.msra.mxu0 %v436
  %514 = vmatprep.subr.mxu0 0.0
  %515 = vmatpush1.msra.mxu0 0.0
  %516 = vmatprep.subr.mxu0 0.0
  %517 = vmatpush1.msra.mxu0 0.0
  %518 = vmatprep.subr.mxu0 0.0
  %519 = vmatpush1.msra.mxu0 0.0
  %520 = vmatprep.subr.mxu0 0.0
  %521 = vmatpush1.msra.mxu0 0.0
  %522 = vmatprep.subr.mxu0 0.0
  %523 = vmatpush1.msra.mxu0 0.0
  %524 = vmatprep.subr.mxu0 0.0
  %525 = vmatpush1.msra.mxu0 0.0
  %526 = vmatprep.subr.mxu0 0.0
  %527 = vmatpush1.msra.mxu0 0.0
  %528 = vmatprep.subr.mxu0 0.0
  %529 = vmatpush1.msra.mxu0 0.0
  %530 = vmatprep.subr.mxu0 0.0
  %531 = vmatpush1.msra.mxu0 0.0
  %532 = vmatprep.subr.mxu0 0.0
  %533 = vmatpush1.msra.mxu0 0.0
  %534 = vmatprep.subr.mxu0 0.0
  %535 = vmatpush1.msra.mxu0 0.0
  %536 = vmatprep.subr.mxu0 0.0
  %537 = vmatpush1.msra.mxu0 0.0
  %538 = vmatprep.subr.mxu0 0.0
  %539 = vmatpush1.msra.mxu0 0.0
  %540 = vmatprep.subr.mxu0 0.0
  %541 = vmatpush1.msra.mxu0 0.0
  %542 = vmatprep.subr.mxu0 0.0
  %543 = vmatpush1.msra.mxu0 0.0
  %544 = vmatprep.subr.mxu0 0.0
  %545 = vmatpush1.msra.mxu0 0.0
  %546 = vmatprep.subr.mxu0 0.0
  %547 = vmatpush1.msra.mxu0 0.0
  %548 = vmatprep.subr.mxu0 0.0
  %549 = vmatpush1.msra.mxu0 0.0
  %550 = vmatprep.subr.mxu0 0.0
  %551 = vmatpush1.msra.mxu0 0.0
  %552 = vmatprep.subr.mxu0 0.0
  %553 = vmatpush1.msra.mxu0 0.0
  %554 = vmatprep.subr.mxu0 0.0
  %555 = vmatpush1.msra.mxu0 0.0
  %556 = vmatprep.subr.mxu0 0.0
  %557 = vmatpush1.msra.mxu0 0.0
  %558 = vmatprep.subr.mxu0 0.0
  %559 = vmatpush1.msra.mxu0 0.0
  %560 = vmatprep.subr.mxu0 0.0
  %561 = vmatpush1.msra.mxu0 0.0
  %562 = vmatprep.subr.mxu0 0.0
  %563 = vmatpush1.msra.mxu0 0.0
  %564 = vmatprep.subr.mxu0 0.0
  %565 = vmatpush1.msra.mxu0 0.0
  %566 = vmatprep.subr.mxu0 0.0
  %567 = vmatpush1.msra.mxu0 0.0
  %568 = vmatprep.subr.mxu0 0.0
  %569 = vmatpush1.msra.mxu0 0.0
  %570 = vmatprep.subr.mxu0 0.0
  %571 = vmatpush1.msra.mxu0 0.0
  %572 = vmatprep.subr.mxu0 0.0
  %573 = vmatpush1.msra.mxu0 0.0
  %574 = vmatprep.subr.mxu0 0.0
  %575 = vmatpush1.msra.mxu0 0.0
  %576 = vmatprep.mubr.f32.mxu0 0.0
  %577 = vmatmul.mubr.f32.gmra.mrb[0].mxu0 %v426
  %v578 = vpop.f32.mrb[0].mxu0
  %v579 = vadd.f32 %v422, %v578
  %v580 = vpop.f32.mrb[0].mxu0
  %v581 = vadd.f32 %v422, %v580
  %582 = vdwg.mxu0
  %vm583 = vcmp.ge.f32.partialorder %v508, 0.0
  %vm584 = vcmp.ge.f32.partialorder %v510, 0.0
  %vm585 = vcmp.ge.f32.partialorder %v579, 0.0
  %vm586 = vcmp.ge.f32.partialorder %v581, 0.0
  %v587 = vmul.f32 %v508, 0.2
  %v588 = vmul.f32 %v510, 0.2
  %v589 = vmul.f32 %v579, 0.2
  %v590 = vmul.f32 %v581, 0.2
  %v591 = vsel %vm583, %v508, %v587
  %v592 = vsel %vm584, %v510, %v588
  %v593 = vsel %vm585, %v579, %v589
  %v594 = vsel %vm586, %v581, %v590
  %v595 = vld [vmem:[%s5] sm:$0xff]
  %v596 = vld [vmem:[%s5 + $0x8] sm:$0xff]
  %v597 = vld [vmem:[%s5 + $0x10] sm:$0xff]
  %v598 = vld [vmem:[%s5 + $0x18] sm:$0xff]
  %v599 = vld [vmem:[%s5 + $0x20] sm:$0xff]
  %v600 = vld [vmem:[%s5 + $0x28] sm:$0xff]
  %v601 = vld [vmem:[%s5 + $0x30] sm:$0xff]
  %v602 = vld [vmem:[%s5 + $0x38] sm:$0xff]
  %v603 = vld [vmem:[%s5 + $0x40] sm:$0xff]
  %v604 = vld [vmem:[%s5 + $0x48] sm:$0xff]
  %v605 = vld [vmem:[%s5 + $0x50] sm:$0xff]
  %v606 = vld [vmem:[%s5 + $0x58] sm:$0xff]
  %v607 = vld [vmem:[%s5 + $0x60] sm:$0xff]
  %v608 = vld [vmem:[%s5 + $0x68] sm:$0xff]
  %v609 = vld [vmem:[%s5 + $0x70] sm:$0xff]
  %v610 = vld [vmem:[%s5 + $0x78] sm:$0xff]
  %v611 = vld [vmem:[%s5 + $0x80] sm:$0xff]
  %v612 = vld [vmem:[%s5 + $0x88] sm:$0xff]
  %v613 = vld [vmem:[%s5 + $0x90] sm:$0xff]
  %v614 = vld [vmem:[%s5 + $0x98] sm:$0xff]
  %v615 = vld [vmem:[%s5 + $0xa0] sm:$0xff]
  %v616 = vld [vmem:[%s5 + $0xa8] sm:$0xff]
  %v617 = vld [vmem:[%s5 + $0xb0] sm:$0xff]
  %v618 = vld [vmem:[%s5 + $0xb8] sm:$0xff]
  %v619 = vld [vmem:[%s5 + $0xc0] sm:$0xff]
  %v620 = vld [vmem:[%s5 + $0xc8] sm:$0xff]
  %v621 = vld [vmem:[%s5 + $0xd0] sm:$0xff]
  %v622 = vld [vmem:[%s5 + $0xd8] sm:$0xff]
  %v623 = vld [vmem:[%s5 + $0xe0] sm:$0xff]
  %v624 = vld [vmem:[%s5 + $0xe8] sm:$0xff]
  %v625 = vld [vmem:[%s5 + $0xf0] sm:$0xff]
  %v626 = vld [vmem:[%s5 + $0xf8] sm:$0xff]
  %v627 = vld [vmem:[%s5 + $0x100] sm:$0xff]
  %v628 = vld [vmem:[%s5 + $0x108] sm:$0xff]
  %v629 = vld [vmem:[%s5 + $0x110] sm:$0xff]
  %v630 = vld [vmem:[%s5 + $0x118] sm:$0xff]
  %v631 = vld [vmem:[%s5 + $0x120] sm:$0xff]
  %v632 = vld [vmem:[%s5 + $0x128] sm:$0xff]
  %v633 = vld [vmem:[%s5 + $0x130] sm:$0xff]
  %v634 = vld [vmem:[%s5 + $0x138] sm:$0xff]
  %v635 = vld [vmem:[%s5 + $0x140] sm:$0xff]
  %v636 = vld [vmem:[%s5 + $0x148] sm:$0xff]
  %v637 = vld [vmem:[%s5 + $0x150] sm:$0xff]
  %v638 = vld [vmem:[%s5 + $0x158] sm:$0xff]
  %v639 = vld [vmem:[%s5 + $0x160] sm:$0xff]
  %v640 = vld [vmem:[%s5 + $0x168] sm:$0xff]
  %v641 = vld [vmem:[%s5 + $0x170] sm:$0xff]
  %v642 = vld [vmem:[%s5 + $0x178] sm:$0xff]
  %v643 = vld [vmem:[%s6] sm:$0xff]
  %v644 = vld [vmem:[%s6 + $0x8] sm:$0xff]
  %v645 = vld [vmem:[%s6 + $0x10] sm:$0xff]
  %v646 = vld [vmem:[%s6 + $0x18] sm:$0xff]
  %v647 = vld [vmem:[%s6 + $0x20] sm:$0xff]
  %v648 = vld [vmem:[%s6 + $0x28] sm:$0xff]
  %v649 = vld [vmem:[%s6 + $0x30] sm:$0xff]
  %v650 = vld [vmem:[%s6 + $0x38] sm:$0xff]
  %v651 = vld [vmem:[%s6 + $0x40] sm:$0xff]
  %v652 = vld [vmem:[%s6 + $0x48] sm:$0xff]
  %v653 = vld [vmem:[%s6 + $0x50] sm:$0xff]
  %v654 = vld [vmem:[%s6 + $0x58] sm:$0xff]
  %v655 = vld [vmem:[%s6 + $0x60] sm:$0xff]
  %v656 = vld [vmem:[%s6 + $0x68] sm:$0xff]
  %v657 = vld [vmem:[%s6 + $0x70] sm:$0xff]
  %v658 = vld [vmem:[%s6 + $0x78] sm:$0xff]
  %v659 = vld [vmem:[%s6 + $0x80] sm:$0xff]
  %v660 = vld [vmem:[%s6 + $0x88] sm:$0xff]
  %v661 = vld [vmem:[%s6 + $0x90] sm:$0xff]
  %v662 = vld [vmem:[%s6 + $0x98] sm:$0xff]
  %v663 = vld [vmem:[%s6 + $0xa0] sm:$0xff]
  %v664 = vld [vmem:[%s6 + $0xa8] sm:$0xff]
  %v665 = vld [vmem:[%s6 + $0xb0] sm:$0xff]
  %v666 = vld [vmem:[%s6 + $0xb8] sm:$0xff]
  %v667 = vld [vmem:[%s6 + $0xc0] sm:$0xff]
  %v668 = vld [vmem:[%s6 + $0xc8] sm:$0xff]
  %v669 = vld [vmem:[%s6 + $0xd0] sm:$0xff]
  %v670 = vld [vmem:[%s6 + $0xd8] sm:$0xff]
  %v671 = vld [vmem:[%s6 + $0xe0] sm:$0xff]
  %v672 = vld [vmem:[%s6 + $0xe8] sm:$0xff]
  %v673 = vld [vmem:[%s6 + $0xf0] sm:$0xff]
  %v674 = vld [vmem:[%s6 + $0xf8] sm:$0xff]
  %v675 = vld [vmem:[%s6 + $0x100] sm:$0xff]
  %v676 = vld [vmem:[%s6 + $0x108] sm:$0xff]
  %v677 = vld [vmem:[%s6 + $0x110] sm:$0xff]
  %v678 = vld [vmem:[%s6 + $0x118] sm:$0xff]
  %v679 = vld [vmem:[%s6 + $0x120] sm:$0xff]
  %v680 = vld [vmem:[%s6 + $0x128] sm:$0xff]
  %v681 = vld [vmem:[%s6 + $0x130] sm:$0xff]
  %v682 = vld [vmem:[%s6 + $0x138] sm:$0xff]
  %v683 = vld [vmem:[%s6 + $0x140] sm:$0xff]
  %v684 = vld [vmem:[%s6 + $0x148] sm:$0xff]
  %v685 = vld [vmem:[%s6 + $0x150] sm:$0xff]
  %v686 = vld [vmem:[%s6 + $0x158] sm:$0xff]
  %v687 = vld [vmem:[%s6 + $0x160] sm:$0xff]
  %v688 = vld [vmem:[%s6 + $0x168] sm:$0xff]
  %v689 = vld [vmem:[%s6 + $0x170] sm:$0xff]
  %v690 = vld [vmem:[%s6 + $0x178] sm:$0xff]
  %692 = vset.pattern.permute.xlu0 0
  %693 = vperm.xlu0 %692, %v643
  %v694 = vpop.permute.xlu0 %693
  %697 = vset.pattern.permute.xlu0 0
  %698 = vperm.xlu0 %697, %v644
  %v699 = vpop.permute.xlu0 %698
  %702 = vset.pattern.permute.xlu0 0
  %703 = vperm.xlu0 %702, %v645
  %v704 = vpop.permute.xlu0 %703
  %707 = vset.pattern.permute.xlu0 0
  %708 = vperm.xlu0 %707, %v646
  %v709 = vpop.permute.xlu0 %708
  %712 = vset.pattern.permute.xlu0 0
  %713 = vperm.xlu0 %712, %v647
  %v714 = vpop.permute.xlu0 %713
  %717 = vset.pattern.permute.xlu0 0
  %718 = vperm.xlu0 %717, %v648
  %v719 = vpop.permute.xlu0 %718
  %722 = vset.pattern.permute.xlu0 0
  %723 = vperm.xlu0 %722, %v649
  %v724 = vpop.permute.xlu0 %723
  %727 = vset.pattern.permute.xlu0 0
  %728 = vperm.xlu0 %727, %v650
  %v729 = vpop.permute.xlu0 %728
  %732 = vset.pattern.permute.xlu0 0
  %733 = vperm.xlu0 %732, %v651
  %v734 = vpop.permute.xlu0 %733
  %737 = vset.pattern.permute.xlu0 0
  %738 = vperm.xlu0 %737, %v652
  %v739 = vpop.permute.xlu0 %738
  %742 = vset.pattern.permute.xlu0 0
  %743 = vperm.xlu0 %742, %v653
  %v744 = vpop.permute.xlu0 %743
  %747 = vset.pattern.permute.xlu0 0
  %748 = vperm.xlu0 %747, %v654
  %v749 = vpop.permute.xlu0 %748
  %752 = vset.pattern.permute.xlu0 0
  %753 = vperm.xlu0 %752, %v655
  %v754 = vpop.permute.xlu0 %753
  %756 = vset.pattern.permute.xlu0 0
  %757 = vperm.xlu0 %756, %v656
  %v758 = vpop.permute.xlu0 %757
  %760 = vset.pattern.permute.xlu0 0
  %761 = vperm.xlu0 %760, %v657
  %v762 = vpop.permute.xlu0 %761
  %764 = vset.pattern.permute.xlu0 0
  %765 = vperm.xlu0 %764, %v658
  %v766 = vpop.permute.xlu0 %765
  %768 = vset.pattern.permute.xlu0 0
  %769 = vperm.xlu0 %768, %v659
  %v770 = vpop.permute.xlu0 %769
  %773 = vset.pattern.permute.xlu0 0
  %774 = vperm.xlu0 %773, %v660
  %v775 = vpop.permute.xlu0 %774
  %778 = vset.pattern.permute.xlu0 0
  %779 = vperm.xlu0 %778, %v661
  %v780 = vpop.permute.xlu0 %779
  %783 = vset.pattern.permute.xlu0 0
  %784 = vperm.xlu0 %783, %v662
  %v785 = vpop.permute.xlu0 %784
  %788 = vset.pattern.permute.xlu0 0
  %789 = vperm.xlu0 %788, %v663
  %v790 = vpop.permute.xlu0 %789
  %793 = vset.pattern.permute.xlu0 0
  %794 = vperm.xlu0 %793, %v664
  %v795 = vpop.permute.xlu0 %794
  %798 = vset.pattern.permute.xlu0 0
  %799 = vperm.xlu0 %798, %v665
  %v800 = vpop.permute.xlu0 %799
  %802 = vset.pattern.permute.xlu0 0
  %803 = vperm.xlu0 %802, %v666
  %v804 = vpop.permute.xlu0 %803
  %806 = vset.pattern.permute.xlu0 0
  %807 = vperm.xlu0 %806, %v667
  %v808 = vpop.permute.xlu0 %807
  %810 = vset.pattern.permute.xlu0 0
  %811 = vperm.xlu0 %810, %v668
  %v812 = vpop.permute.xlu0 %811
  %814 = vset.pattern.permute.xlu0 0
  %815 = vperm.xlu0 %814, %v669
  %v816 = vpop.permute.xlu0 %815
  %818 = vset.pattern.permute.xlu0 0
  %819 = vperm.xlu0 %818, %v670
  %v820 = vpop.permute.xlu0 %819
  %822 = vset.pattern.permute.xlu0 0
  %823 = vperm.xlu0 %822, %v671
  %v824 = vpop.permute.xlu0 %823
  %826 = vset.pattern.permute.xlu0 0
  %827 = vperm.xlu0 %826, %v672
  %v828 = vpop.permute.xlu0 %827
  %830 = vset.pattern.permute.xlu0 0
  %831 = vperm.xlu0 %830, %v673
  %v832 = vpop.permute.xlu0 %831
  %834 = vset.pattern.permute.xlu0 0
  %835 = vperm.xlu0 %834, %v674
  %v836 = vpop.permute.xlu0 %835
  %838 = vset.pattern.permute.xlu0 0
  %839 = vperm.xlu0 %838, %v675
  %v840 = vpop.permute.xlu0 %839
  %843 = vset.pattern.permute.xlu0 0
  %844 = vperm.xlu0 %843, %v676
  %v845 = vpop.permute.xlu0 %844
  %848 = vset.pattern.permute.xlu0 0
  %849 = vperm.xlu0 %848, %v677
  %v850 = vpop.permute.xlu0 %849
  %852 = vset.pattern.permute.xlu0 0
  %853 = vperm.xlu0 %852, %v678
  %v854 = vpop.permute.xlu0 %853
  %856 = vset.pattern.permute.xlu0 0
  %857 = vperm.xlu0 %856, %v679
  %v858 = vpop.permute.xlu0 %857
  %860 = vset.pattern.permute.xlu0 0
  %861 = vperm.xlu0 %860, %v680
  %v862 = vpop.permute.xlu0 %861
  %864 = vset.pattern.permute.xlu0 0
  %865 = vperm.xlu0 %864, %v681
  %v866 = vpop.permute.xlu0 %865
  %868 = vset.pattern.permute.xlu0 0
  %869 = vperm.xlu0 %868, %v682
  %v870 = vpop.permute.xlu0 %869
  %872 = vset.pattern.permute.xlu0 0
  %873 = vperm.xlu0 %872, %v683
  %v874 = vpop.permute.xlu0 %873
  %876 = vset.pattern.permute.xlu0 0
  %877 = vperm.xlu0 %876, %v684
  %v878 = vpop.permute.xlu0 %877
  %880 = vset.pattern.permute.xlu0 0
  %881 = vperm.xlu0 %880, %v685
  %v882 = vpop.permute.xlu0 %881
  %884 = vset.pattern.permute.xlu0 0
  %885 = vperm.xlu0 %884, %v686
  %v886 = vpop.permute.xlu0 %885
  %888 = vset.pattern.permute.xlu0 0
  %889 = vperm.xlu0 %888, %v687
  %v890 = vpop.permute.xlu0 %889
  %892 = vset.pattern.permute.xlu0 0
  %893 = vperm.xlu0 %892, %v688
  %v894 = vpop.permute.xlu0 %893
  %896 = vset.pattern.permute.xlu0 0
  %897 = vperm.xlu0 %896, %v689
  %v898 = vpop.permute.xlu0 %897
  %900 = vset.pattern.permute.xlu0 0
  %901 = vperm.xlu0 %900, %v690
  %v902 = vpop.permute.xlu0 %901
  %v904 = vsel %vm424, %v595, 0
  %v907 = vsel %vm424, %v596, 0
  %v910 = vsel %vm424, %v597, 0
  %v913 = vsel %vm424, %v598, 0
  %v916 = vsel %vm424, %v599, 0
  %v919 = vsel %vm424, %v600, 0
  %v922 = vsel %vm424, %v601, 0
  %v925 = vsel %vm424, %v602, 0
  %v928 = vsel %vm424, %v603, 0
  %v931 = vsel %vm424, %v604, 0
  %v934 = vsel %vm424, %v605, 0
  %v937 = vsel %vm424, %v606, 0
  %v940 = vsel %vm424, %v607, 0
  %v943 = vsel %vm424, %v608, 0
  %v946 = vsel %vm424, %v609, 0
  %v949 = vsel %vm424, %v610, 0
  %v952 = vsel %vm424, %v611, 0
  %v955 = vsel %vm424, %v612, 0
  %v958 = vsel %vm424, %v613, 0
  %v961 = vsel %vm424, %v614, 0
  %v964 = vsel %vm424, %v615, 0
  %v967 = vsel %vm424, %v616, 0
  %v970 = vsel %vm424, %v617, 0
  %v973 = vsel %vm424, %v618, 0
  %v976 = vsel %vm424, %v619, 0
  %v979 = vsel %vm424, %v620, 0
  %v982 = vsel %vm424, %v621, 0
  %v985 = vsel %vm424, %v622, 0
  %v988 = vsel %vm424, %v623, 0
  %v991 = vsel %vm424, %v624, 0
  %v994 = vsel %vm424, %v625, 0
  %v997 = vsel %vm424, %v626, 0
  %v1000 = vsel %vm424, %v627, 0
  %v1003 = vsel %vm424, %v628, 0
  %v1006 = vsel %vm424, %v629, 0
  %v1009 = vsel %vm424, %v630, 0
  %v1012 = vsel %vm424, %v631, 0
  %v1015 = vsel %vm424, %v632, 0
  %v1018 = vsel %vm424, %v633, 0
  %v1021 = vsel %vm424, %v634, 0
  %v1024 = vsel %vm424, %v635, 0
  %v1027 = vsel %vm424, %v636, 0
  %v1030 = vsel %vm424, %v637, 0
  %v1033 = vsel %vm424, %v638, 0
  %v1036 = vsel %vm424, %v639, 0
  %v1039 = vsel %vm424, %v640, 0
  %v1042 = vsel %vm424, %v641, 0
  %v1045 = vsel %vm424, %v642, 0
  %v1048 = vsel %vm428, %v591, 0
  %v1051 = vsel %vm428, %v592, 0
  %v1054 = vsel %vm428, %v593, 0
  %v1057 = vsel %vm428, %v594, 0
  %1059 = vmatprep.subr.mxu0 %v1051
  %1060 = vmatpush1.msra.mxu0 %v1048
  %1061 = vmatprep.subr.mxu0 0.0
  %1062 = vmatpush1.msra.mxu0 0.0
  %1063 = vmatprep.subr.mxu0 0.0
  %1064 = vmatpush1.msra.mxu0 0.0
  %1065 = vmatprep.subr.mxu0 0.0
  %1066 = vmatpush1.msra.mxu0 0.0
  %1067 = vmatprep.subr.mxu0 0.0
  %1068 = vmatpush1.msra.mxu0 0.0
  %1069 = vmatprep.subr.mxu0 0.0
  %1070 = vmatpush1.msra.mxu0 0.0
  %1071 = vmatprep.subr.mxu0 0.0
  %1072 = vmatpush1.msra.mxu0 0.0
  %1073 = vmatprep.subr.mxu0 0.0
  %1074 = vmatpush1.msra.mxu0 0.0
  %1075 = vmatprep.subr.mxu0 0.0
  %1076 = vmatpush1.msra.mxu0 0.0
  %1077 = vmatprep.subr.mxu0 0.0
  %1078 = vmatpush1.msra.mxu0 0.0
  %1079 = vmatprep.subr.mxu0 0.0
  %1080 = vmatpush1.msra.mxu0 0.0
  %1081 = vmatprep.subr.mxu0 0.0
  %1082 = vmatpush1.msra.mxu0 0.0
  %1083 = vmatprep.subr.mxu0 0.0
  %1084 = vmatpush1.msra.mxu0 0.0
  %1085 = vmatprep.subr.mxu0 0.0
  %1086 = vmatpush1.msra.mxu0 0.0
  %1087 = vmatprep.subr.mxu0 0.0
  %1088 = vmatpush1.msra.mxu0 0.0
  %1089 = vmatprep.subr.mxu0 0.0
  %1090 = vmatpush1.msra.mxu0 0.0
  %1091 = vmatprep.subr.mxu0 0.0
  %1092 = vmatpush1.msra.mxu0 0.0
  %1093 = vmatprep.subr.mxu0 0.0
  %1094 = vmatpush1.msra.mxu0 0.0
  %1095 = vmatprep.subr.mxu0 0.0
  %1096 = vmatpush1.msra.mxu0 0.0
  %1097 = vmatprep.subr.mxu0 0.0
  %1098 = vmatpush1.msra.mxu0 0.0
  %1099 = vmatprep.subr.mxu0 0.0
  %1100 = vmatpush1.msra.mxu0 0.0
  %1101 = vmatprep.subr.mxu0 0.0
  %1102 = vmatpush1.msra.mxu0 0.0
  %1103 = vmatprep.subr.mxu0 0.0
  %1104 = vmatpush1.msra.mxu0 0.0
  %1105 = vmatprep.subr.mxu0 0.0
  %1106 = vmatpush1.msra.mxu0 0.0
  %1107 = vmatprep.subr.mxu0 0.0
  %1108 = vmatpush1.msra.mxu0 0.0
  %1109 = vmatprep.subr.mxu0 0.0
  %1110 = vmatpush1.msra.mxu0 0.0
  %1111 = vmatprep.subr.mxu0 0.0
  %1112 = vmatpush1.msra.mxu0 0.0
  %1113 = vmatprep.subr.mxu0 0.0
  %1114 = vmatpush1.msra.mxu0 0.0
  %1115 = vmatprep.subr.mxu0 0.0
  %1116 = vmatpush1.msra.mxu0 0.0
  %1117 = vmatprep.subr.mxu0 0.0
  %1118 = vmatpush1.msra.mxu0 0.0
  %1119 = vmatprep.subr.mxu0 0.0
  %1120 = vmatpush1.msra.mxu0 0.0
  %1121 = vmatprep.subr.mxu0 0.0
  %1122 = vmatpush1.msra.mxu0 0.0
  %1123 = vmatprep.mubr.f32.mxu0 0.0
  %1124 = vmatmul.mubr.f32.gmra.mrb[0].mxu0 %v904
  %v1125 = vpop.f32.mrb[0].mxu0
  %v1126 = vadd.f32 %v694, %v1125
  %v1127 = vpop.f32.mrb[0].mxu0
  %v1128 = vadd.f32 %v694, %v1127
  %1129 = vmatprep.mubr.f32.mxu0 0.0
  %1130 = vmatmul.mubr.f32.gmra.mrb[0].mxu0 %v907
  %v1131 = vpop.f32.mrb[0].mxu0
  %v1132 = vadd.f32 %v699, %v1131
  %v1133 = vpop.f32.mrb[0].mxu0
  %v1134 = vadd.f32 %v699, %v1133
  %1135 = vmatprep.mubr.f32.mxu0 0.0
  %1136 = vmatmul.mubr.f32.gmra.mrb[0].mxu0 %v910
  %v1137 = vpop.f32.mrb[0].mxu0
  %v1138 = vadd.f32 %v704, %v1137
  %v1139 = vpop.f32.mrb[0].mxu0
  %v1140 = vadd.f32 %v704, %v1139
  %1141 = vmatprep.mubr.f32.mxu0 0.0
  %1142 = vmatmul.mubr.f32.gmra.mrb[0].mxu0 %v913
  %v1143 = vpop.f32.mrb[0].mxu0
  %v1144 = vadd.f32 %v709, %v1143
  %v1145 = vpop.f32.mrb[0].mxu0
  %v1146 = vadd.f32 %v709, %v1145
  %1147 = vmatprep.mubr.f32.mxu0 0.0
  %1148 = vmatmul.mubr.f32.gmra.mrb[0].mxu0 %v916
  %v1149 = vpop.f32.mrb[0].mxu0
  %v1150 = vadd.f32 %v714, %v1149
  %v1151 = vpop.f32.mrb[0].mxu0
  %v1152 = vadd.f32 %v714, %v1151
  %1153 = vmatprep.mubr.f32.mxu0 0.0
  %1154 = vmatmul.mubr.f32.gmra.mrb[0].mxu0 %v919
  %v1155 = vpop.f32.mrb[0].mxu0
  %v1156 = vadd.f32 %v719, %v1155
  %v1157 = vpop.f32.mrb[0].mxu0
  %v1158 = vadd.f32 %v719, %v1157
  %1159 = vmatprep.mubr.f32.mxu0 0.0
  %1160 = vmatmul.mubr.f32.gmra.mrb[0].mxu0 %v922
  %v1161 = vpop.f32.mrb[0].mxu0
  %v1162 = vadd.f32 %v724, %v1161
  %v1163 = vpop.f32.mrb[0].mxu0
  %v1164 = vadd.f32 %v724, %v1163
  %1165 = vmatprep.mubr.f32.mxu0 0.0
  %1166 = vmatmul.mubr.f32.gmra.mrb[0].mxu0 %v925
  %v1167 = vpop.f32.mrb[0].mxu0
  %v1168 = vadd.f32 %v729, %v1167
  %v1169 = vpop.f32.mrb[0].mxu0
  %v1170 = vadd.f32 %v729, %v1169
  %1171 = vmatprep.mubr.f32.mxu0 0.0
  %1172 = vmatmul.mubr.f32.gmra.mrb[0].mxu0 %v928
  %v1173 = vpop.f32.mrb[0].mxu0
  %v1174 = vadd.f32 %v734, %v1173
  %v1175 = vpop.f32.mrb[0].mxu0
  %v1176 = vadd.f32 %v734, %v1175
  %1177 = vmatprep.mubr.f32.mxu0 0.0
  %1178 = vmatmul.mubr.f32.gmra.mrb[0].mxu0 %v931
  %v1179 = vpop.f32.mrb[0].mxu0
  %v1180 = vadd.f32 %v739, %v1179
  %v1181 = vpop.f32.mrb[0].mxu0
  %v1182 = vadd.f32 %v739, %v1181
  %1183 = vmatprep.mubr.f32.mxu0 0.0
  %1184 = vmatmul.mubr.f32.gmra.mrb[0].mxu0 %v934
  %v1185 = vpop.f32.mrb[0].mxu0
  %v1186 = vadd.f32 %v744, %v1185
  %v1187 = vpop.f32.mrb[0].mxu0
  %v1188 = vadd.f32 %v744, %v1187
  %1189 = vmatprep.mubr.f32.mxu0 0.0
  %1190 = vmatmul.mubr.f32.gmra.mrb[0].mxu0 %v937
  %v1191 = vpop.f32.mrb[0].mxu0
  %v1192 = vadd.f32 %v749, %v1191
  %v1193 = vpop.f32.mrb[0].mxu0
  %v1194 = vadd.f32 %v749, %v1193
  %1195 = vmatprep.mubr.f32.mxu0 0.0
  %1196 = vmatmul.mubr.f32.gmra.mrb[0].mxu0 %v940
  %v1197 = vpop.f32.mrb[0].mxu0
  %v1198 = vpop.f32.mrb[0].mxu0
  %1199 = vmatprep.mubr.f32.mxu0 0.0
  %1200 = vmatmul.mubr.f32.gmra.mrb[0].mxu0 %v943
  %v1201 = vpop.f32.mrb[0].mxu0
  %v1202 = vpop.f32.mrb[0].mxu0
  %1203 = vmatprep.mubr.f32.mxu0 0.0
  %1204 = vmatmul.mubr.f32.gmra.mrb[0].mxu0 %v946
  %v1205 = vpop.f32.mrb[0].mxu0
  %v1206 = vpop.f32.mrb[0].mxu0
  %1207 = vmatprep.mubr.f32.mxu0 0.0
  %1208 = vmatmul.mubr.f32.gmra.mrb[0].mxu0 %v949
  %v1209 = vpop.f32.mrb[0].mxu0
  %v1210 = vpop.f32.mrb[0].mxu0
  %1211 = vmatprep.mubr.f32.mxu0 0.0
  %1212 = vmatmul.mubr.f32.gmra.mrb[0].mxu0 %v952
  %v1213 = vpop.f32.mrb[0].mxu0
  %v1214 = vadd.f32 %v770, %v1213
  %v1215 = vpop.f32.mrb[0].mxu0
  %v1216 = vadd.f32 %v770, %v1215
  %1217 = vmatprep.mubr.f32.mxu0 0.0
  %1218 = vmatmul.mubr.f32.gmra.mrb[0].mxu0 %v955
  %v1219 = vpop.f32.mrb[0].mxu0
  %v1220 = vadd.f32 %v775, %v1219
  %v1221 = vpop.f32.mrb[0].mxu0
  %v1222 = vadd.f32 %v775, %v1221
  %1223 = vmatprep.mubr.f32.mxu0 0.0
  %1224 = vmatmul.mubr.f32.gmra.mrb[0].mxu0 %v958
  %v1225 = vpop.f32.mrb[0].mxu0
  %v1226 = vadd.f32 %v780, %v1225
  %v1227 = vpop.f32.mrb[0].mxu0
  %v1228 = vadd.f32 %v780, %v1227
  %1229 = vmatprep.mubr.f32.mxu0 0.0
  %1230 = vmatmul.mubr.f32.gmra.mrb[0].mxu0 %v961
  %v1231 = vpop.f32.mrb[0].mxu0
  %v1232 = vadd.f32 %v785, %v1231
  %v1233 = vpop.f32.mrb[0].mxu0
  %v1234 = vadd.f32 %v785, %v1233
  %1235 = vmatprep.mubr.f32.mxu0 0.0
  %1236 = vmatmul.mubr.f32.gmra.mrb[0].mxu0 %v964
  %v1237 = vpop.f32.mrb[0].mxu0
  %v1238 = vadd.f32 %v790, %v1237
  %v1239 = vpop.f32.mrb[0].mxu0
  %v1240 = vadd.f32 %v790, %v1239
  %1241 = vmatprep.mubr.f32.mxu0 0.0
  %1242 = vmatmul.mubr.f32.gmra.mrb[0].mxu0 %v967
  %v1243 = vpop.f32.mrb[0].mxu0
  %v1244 = vadd.f32 %v795, %v1243
  %v1245 = vpop.f32.mrb[0].mxu0
  %v1246 = vadd.f32 %v795, %v1245
  %1247 = vmatprep.mubr.f32.mxu0 0.0
  %1248 = vmatmul.mubr.f32.gmra.mrb[0].mxu0 %v970
  %v1249 = vpop.f32.mrb[0].mxu0
  %v1250 = vpop.f32.mrb[0].mxu0
  %1251 = vmatprep.mubr.f32.mxu0 0.0
  %1252 = vmatmul.mubr.f32.gmra.mrb[0].mxu0 %v973
  %v1253 = vpop.f32.mrb[0].mxu0
  %v1254 = vpop.f32.mrb[0].mxu0
  %1255 = vmatprep.mubr.f32.mxu0 0.0
  %1256 = vmatmul.mubr.f32.gmra.mrb[0].mxu0 %v976
  %v1257 = vpop.f32.mrb[0].mxu0
  %v1258 = vpop.f32.mrb[0].mxu0
  %1259 = vmatprep.mubr.f32.mxu0 0.0
  %1260 = vmatmul.mubr.f32.gmra.mrb[0].mxu0 %v979
  %v1261 = vpop.f32.mrb[0].mxu0
  %v1262 = vpop.f32.mrb[0].mxu0
  %1263 = vmatprep.mubr.f32.mxu0 0.0
  %1264 = vmatmul.mubr.f32.gmra.mrb[0].mxu0 %v982
  %v1265 = vpop.f32.mrb[0].mxu0
  %v1266 = vpop.f32.mrb[0].mxu0
  %1267 = vmatprep.mubr.f32.mxu0 0.0
  %1268 = vmatmul.mubr.f32.gmra.mrb[0].mxu0 %v985
  %v1269 = vpop.f32.mrb[0].mxu0
  %v1270 = vpop.f32.mrb[0].mxu0
  %1271 = vmatprep.mubr.f32.mxu0 0.0
  %1272 = vmatmul.mubr.f32.gmra.mrb[0].mxu0 %v988
  %v1273 = vpop.f32.mrb[0].mxu0
  %v1274 = vpop.f32.mrb[0].mxu0
  %1275 = vmatprep.mubr.f32.mxu0 0.0
  %1276 = vmatmul.mubr.f32.gmra.mrb[0].mxu0 %v991
  %v1277 = vpop.f32.mrb[0].mxu0
  %v1278 = vpop.f32.mrb[0].mxu0
  %1279 = vmatprep.mubr.f32.mxu0 0.0
  %1280 = vmatmul.mubr.f32.gmra.mrb[0].mxu0 %v994
  %v1281 = vpop.f32.mrb[0].mxu0
  %v1282 = vpop.f32.mrb[0].mxu0
  %1283 = vmatprep.mubr.f32.mxu0 0.0
  %1284 = vmatmul.mubr.f32.gmra.mrb[0].mxu0 %v997
  %v1285 = vpop.f32.mrb[0].mxu0
  %v1286 = vpop.f32.mrb[0].mxu0
  %1287 = vmatprep.mubr.f32.mxu0 0.0
  %1288 = vmatmul.mubr.f32.gmra.mrb[0].mxu0 %v1000
  %v1289 = vpop.f32.mrb[0].mxu0
  %v1290 = vadd.f32 %v840, %v1289
  %v1291 = vpop.f32.mrb[0].mxu0
  %v1292 = vadd.f32 %v840, %v1291
  %1293 = vmatprep.mubr.f32.mxu0 0.0
  %1294 = vmatmul.mubr.f32.gmra.mrb[0].mxu0 %v1003
  %v1295 = vpop.f32.mrb[0].mxu0
  %v1296 = vadd.f32 %v845, %v1295
  %v1297 = vpop.f32.mrb[0].mxu0
  %v1298 = vadd.f32 %v845, %v1297
  %1299 = vmatprep.mubr.f32.mxu0 0.0
  %1300 = vmatmul.mubr.f32.gmra.mrb[0].mxu0 %v1006
  %v1301 = vpop.f32.mrb[0].mxu0
  %v1302 = vpop.f32.mrb[0].mxu0
  %1303 = vmatprep.mubr.f32.mxu0 0.0
  %1304 = vmatmul.mubr.f32.gmra.mrb[0].mxu0 %v1009
  %v1305 = vpop.f32.mrb[0].mxu0
  %v1306 = vpop.f32.mrb[0].mxu0
  %1307 = vmatprep.mubr.f32.mxu0 0.0
  %1308 = vmatmul.mubr.f32.gmra.mrb[0].mxu0 %v1012
  %v1309 = vpop.f32.mrb[0].mxu0
  %v1310 = vpop.f32.mrb[0].mxu0
  %1311 = vmatprep.mubr.f32.mxu0 0.0
  %1312 = vmatmul.mubr.f32.gmra.mrb[0].mxu0 %v1015
  %v1313 = vpop.f32.mrb[0].mxu0
  %v1314 = vpop.f32.mrb[0].mxu0
  %1315 = vmatprep.mubr.f32.mxu0 0.0
  %1316 = vmatmul.mubr.f32.gmra.mrb[0].mxu0 %v1018
  %v1317 = vpop.f32.mrb[0].mxu0
  %v1318 = vpop.f32.mrb[0].mxu0
  %1319 = vmatprep.mubr.f32.mxu0 0.0
  %1320 = vmatmul.mubr.f32.gmra.mrb[0].mxu0 %v1021
  %v1321 = vpop.f32.mrb[0].mxu0
  %v1322 = vpop.f32.mrb[0].mxu0
  %1323 = vmatprep.mubr.f32.mxu0 0.0
  %1324 = vmatmul.mubr.f32.gmra.mrb[0].mxu0 %v1024
  %v1325 = vpop.f32.mrb[0].mxu0
  %v1326 = vpop.f32.mrb[0].mxu0
  %1327 = vmatprep.mubr.f32.mxu0 0.0
  %1328 = vmatmul.mubr.f32.gmra.mrb[0].mxu0 %v1027
  %v1329 = vpop.f32.mrb[0].mxu0
  %v1330 = vpop.f32.mrb[0].mxu0
  %1331 = vmatprep.mubr.f32.mxu0 0.0
  %1332 = vmatmul.mubr.f32.gmra.mrb[0].mxu0 %v1030
  %v1333 = vpop.f32.mrb[0].mxu0
  %v1334 = vpop.f32.mrb[0].mxu0
  %1335 = vmatprep.mubr.f32.mxu0 0.0
  %1336 = vmatmul.mubr.f32.gmra.mrb[0].mxu0 %v1033
  %v1337 = vpop.f32.mrb[0].mxu0
  %v1338 = vpop.f32.mrb[0].mxu0
  %1339 = vmatprep.mubr.f32.mxu0 0.0
  %1340 = vmatmul.mubr.f32.gmra.mrb[0].mxu0 %v1036
  %v1341 = vpop.f32.mrb[0].mxu0
  %v1342 = vpop.f32.mrb[0].mxu0
  %1343 = vmatprep.mubr.f32.mxu0 0.0
  %1344 = vmatmul.mubr.f32.gmra.mrb[0].mxu0 %v1039
  %v1345 = vpop.f32.mrb[0].mxu0
  %v1346 = vpop.f32.mrb[0].mxu0
  %1347 = vmatprep.mubr.f32.mxu0 0.0
  %1348 = vmatmul.mubr.f32.gmra.mrb[0].mxu0 %v1042
  %v1349 = vpop.f32.mrb[0].mxu0
  %v1350 = vpop.f32.mrb[0].mxu0
  %1351 = vmatprep.mubr.f32.mxu0 0.0
  %1352 = vmatmul.mubr.f32.gmra.mrb[0].mxu0 %v1045
  %v1353 = vpop.f32.mrb[0].mxu0
  %v1354 = vpop.f32.mrb[0].mxu0
  %1355 = vdwg.mxu0
  %1356 = vmatprep.subr.mxu0 %v1057
  %1357 = vmatpush1.msra.mxu0 %v1054
  %1358 = vmatprep.subr.mxu0 0.0
  %1359 = vmatpush1.msra.mxu0 0.0
  %1360 = vmatprep.subr.mxu0 0.0
  %1361 = vmatpush1.msra.mxu0 0.0
  %1362 = vmatprep.subr.mxu0 0.0
  %1363 = vmatpush1.msra.mxu0 0.0
  %1364 = vmatprep.subr.mxu0 0.0
  %1365 = vmatpush1.msra.mxu0 0.0
  %1366 = vmatprep.subr.mxu0 0.0
  %1367 = vmatpush1.msra.mxu0 0.0
  %1368 = vmatprep.subr.mxu0 0.0
  %1369 = vmatpush1.msra.mxu0 0.0
  %1370 = vmatprep.subr.mxu0 0.0
  %1371 = vmatpush1.msra.mxu0 0.0
  %1372 = vmatprep.subr.mxu0 0.0
  %1373 = vmatpush1.msra.mxu0 0.0
  %1374 = vmatprep.subr.mxu0 0.0
  %1375 = vmatpush1.msra.mxu0 0.0
  %1376 = vmatprep.subr.mxu0 0.0
  %1377 = vmatpush1.msra.mxu0 0.0
  %1378 = vmatprep.subr.mxu0 0.0
  %1379 = vmatpush1.msra.mxu0 0.0
  %1380 = vmatprep.subr.mxu0 0.0
  %1381 = vmatpush1.msra.mxu0 0.0
  %1382 = vmatprep.subr.mxu0 0.0
  %1383 = vmatpush1.msra.mxu0 0.0
  %1384 = vmatprep.subr.mxu0 0.0
  %1385 = vmatpush1.msra.mxu0 0.0
  %1386 = vmatprep.subr.mxu0 0.0
  %1387 = vmatpush1.msra.mxu0 0.0
  %1388 = vmatprep.subr.mxu0 0.0
  %1389 = vmatpush1.msra.mxu0 0.0
  %1390 = vmatprep.subr.mxu0 0.0
  %1391 = vmatpush1.msra.mxu0 0.0
  %1392 = vmatprep.subr.mxu0 0.0
  %1393 = vmatpush1.msra.mxu0 0.0
  %1394 = vmatprep.subr.mxu0 0.0
  %1395 = vmatpush1.msra.mxu0 0.0
  %1396 = vmatprep.subr.mxu0 0.0
  %1397 = vmatpush1.msra.mxu0 0.0
  %1398 = vmatprep.subr.mxu0 0.0
  %1399 = vmatpush1.msra.mxu0 0.0
  %1400 = vmatprep.subr.mxu0 0.0
  %1401 = vmatpush1.msra.mxu0 0.0
  %1402 = vmatprep.subr.mxu0 0.0
  %1403 = vmatpush1.msra.mxu0 0.0
  %1404 = vmatprep.subr.mxu0 0.0
  %1405 = vmatpush1.msra.mxu0 0.0
  %1406 = vmatprep.subr.mxu0 0.0
  %1407 = vmatpush1.msra.mxu0 0.0
  %1408 = vmatprep.subr.mxu0 0.0
  %1409 = vmatpush1.msra.mxu0 0.0
  %1410 = vmatprep.subr.mxu0 0.0
  %1411 = vmatpush1.msra.mxu0 0.0
  %1412 = vmatprep.subr.mxu0 0.0
  %1413 = vmatpush1.msra.mxu0 0.0
  %1414 = vmatprep.subr.mxu0 0.0
  %1415 = vmatpush1.msra.mxu0 0.0
  %1416 = vmatprep.subr.mxu0 0.0
  %1417 = vmatpush1.msra.mxu0 0.0
  %1418 = vmatprep.subr.mxu0 0.0
  %1419 = vmatpush1.msra.mxu0 0.0
  %1420 = vmatprep.mubr.f32.mxu0 0.0
  %1421 = vmatmul.mubr.f32.gmra.mrb[0].mxu0 %v904
  %v1422 = vpop.f32.mrb[0].mxu0
  %v1423 = vadd.f32 %v694, %v1422
  %v1424 = vpop.f32.mrb[0].mxu0
  %v1425 = vadd.f32 %v694, %v1424
  %1426 = vmatprep.mubr.f32.mxu0 0.0
  %1427 = vmatmul.mubr.f32.gmra.mrb[0].mxu0 %v907
  %v1428 = vpop.f32.mrb[0].mxu0
  %v1429 = vadd.f32 %v699, %v1428
  %v1430 = vpop.f32.mrb[0].mxu0
  %v1431 = vadd.f32 %v699, %v1430
  %1432 = vmatprep.mubr.f32.mxu0 0.0
  %1433 = vmatmul.mubr.f32.gmra.mrb[0].mxu0 %v910
  %v1434 = vpop.f32.mrb[0].mxu0
  %v1435 = vadd.f32 %v704, %v1434
  %v1436 = vpop.f32.mrb[0].mxu0
  %v1437 = vadd.f32 %v704, %v1436
  %1438 = vmatprep.mubr.f32.mxu0 0.0
  %1439 = vmatmul.mubr.f32.gmra.mrb[0].mxu0 %v913
  %v1440 = vpop.f32.mrb[0].mxu0
  %v1441 = vadd.f32 %v709, %v1440
  %v1442 = vpop.f32.mrb[0].mxu0
  %v1443 = vadd.f32 %v709, %v1442
  %1444 = vmatprep.mubr.f32.mxu0 0.0
  %1445 = vmatmul.mubr.f32.gmra.mrb[0].mxu0 %v916
  %v1446 = vpop.f32.mrb[0].mxu0
  %v1447 = vadd.f32 %v714, %v1446
  %v1448 = vpop.f32.mrb[0].mxu0
  %v1449 = vadd.f32 %v714, %v1448
  %1450 = vmatprep.mubr.f32.mxu0 0.0
  %1451 = vmatmul.mubr.f32.gmra.mrb[0].mxu0 %v919
  %v1452 = vpop.f32.mrb[0].mxu0
  %v1453 = vadd.f32 %v719, %v1452
  %v1454 = vpop.f32.mrb[0].mxu0
  %v1455 = vadd.f32 %v719, %v1454
  %1456 = vmatprep.mubr.f32.mxu0 0.0
  %1457 = vmatmul.mubr.f32.gmra.mrb[0].mxu0 %v922
  %v1458 = vpop.f32.mrb[0].mxu0
  %v1459 = vadd.f32 %v724, %v1458
  %v1460 = vpop.f32.mrb[0].mxu0
  %v1461 = vadd.f32 %v724, %v1460
  %1462 = vmatprep.mubr.f32.mxu0 0.0
  %1463 = vmatmul.mubr.f32.gmra.mrb[0].mxu0 %v925
  %v1464 = vpop.f32.mrb[0].mxu0
  %v1465 = vadd.f32 %v729, %v1464
  %v1466 = vpop.f32.mrb[0].mxu0
  %v1467 = vadd.f32 %v729, %v1466
  %1468 = vmatprep.mubr.f32.mxu0 0.0
  %1469 = vmatmul.mubr.f32.gmra.mrb[0].mxu0 %v928
  %v1470 = vpop.f32.mrb[0].mxu0
  %v1471 = vadd.f32 %v734, %v1470
  %v1472 = vpop.f32.mrb[0].mxu0
  %v1473 = vadd.f32 %v734, %v1472
  %1474 = vmatprep.mubr.f32.mxu0 0.0
  %1475 = vmatmul.mubr.f32.gmra.mrb[0].mxu0 %v931
  %v1476 = vpop.f32.mrb[0].mxu0
  %v1477 = vadd.f32 %v739, %v1476
  %v1478 = vpop.f32.mrb[0].mxu0
  %v1479 = vadd.f32 %v739, %v1478
  %1480 = vmatprep.mubr.f32.mxu0 0.0
  %1481 = vmatmul.mubr.f32.gmra.mrb[0].mxu0 %v934
  %v1482 = vpop.f32.mrb[0].mxu0
  %v1483 = vadd.f32 %v744, %v1482
  %v1484 = vpop.f32.mrb[0].mxu0
  %v1485 = vadd.f32 %v744, %v1484
  %1486 = vmatprep.mubr.f32.mxu0 0.0
  %1487 = vmatmul.mubr.f32.gmra.mrb[0].mxu0 %v937
  %v1488 = vpop.f32.mrb[0].mxu0
  %v1489 = vadd.f32 %v749, %v1488
  %v1490 = vpop.f32.mrb[0].mxu0
  %v1491 = vadd.f32 %v749, %v1490
  %1492 = vmatprep.mubr.f32.mxu0 0.0
  %1493 = vmatmul.mubr.f32.gmra.mrb[0].mxu0 %v940
  %v1494 = vpop.f32.mrb[0].mxu0
  %v1495 = vpop.f32.mrb[0].mxu0
  %1496 = vmatprep.mubr.f32.mxu0 0.0
  %1497 = vmatmul.mubr.f32.gmra.mrb[0].mxu0 %v943
  %v1498 = vpop.f32.mrb[0].mxu0
  %v1499 = vpop.f32.mrb[0].mxu0
  %1500 = vmatprep.mubr.f32.mxu0 0.0
  %1501 = vmatmul.mubr.f32.gmra.mrb[0].mxu0 %v946
  %v1502 = vpop.f32.mrb[0].mxu0
  %v1503 = vpop.f32.mrb[0].mxu0
  %1504 = vmatprep.mubr.f32.mxu0 0.0
  %1505 = vmatmul.mubr.f32.gmra.mrb[0].mxu0 %v949
  %v1506 = vpop.f32.mrb[0].mxu0
  %v1507 = vpop.f32.mrb[0].mxu0
  %1508 = vmatprep.mubr.f32.mxu0 0.0
  %1509 = vmatmul.mubr.f32.gmra.mrb[0].mxu0 %v952
  %v1510 = vpop.f32.mrb[0].mxu0
  %v1511 = vadd.f32 %v770, %v1510
  %v1512 = vpop.f32.mrb[0].mxu0
  %v1513 = vadd.f32 %v770, %v1512
  %1514 = vmatprep.mubr.f32.mxu0 0.0
  %1515 = vmatmul.mubr.f32.gmra.mrb[0].mxu0 %v955
  %v1516 = vpop.f32.mrb[0].mxu0
  %v1517 = vadd.f32 %v775, %v1516
  %v1518 = vpop.f32.mrb[0].mxu0
  %v1519 = vadd.f32 %v775, %v1518
  %1520 = vmatprep.mubr.f32.mxu0 0.0
  %1521 = vmatmul.mubr.f32.gmra.mrb[0].mxu0 %v958
  %v1522 = vpop.f32.mrb[0].mxu0
  %v1523 = vadd.f32 %v780, %v1522
  %v1524 = vpop.f32.mrb[0].mxu0
  %v1525 = vadd.f32 %v780, %v1524
  %1526 = vmatprep.mubr.f32.mxu0 0.0
  %1527 = vmatmul.mubr.f32.gmra.mrb[0].mxu0 %v961
  %v1528 = vpop.f32.mrb[0].mxu0
  %v1529 = vadd.f32 %v785, %v1528
  %v1530 = vpop.f32.mrb[0].mxu0
  %v1531 = vadd.f32 %v785, %v1530
  %1532 = vmatprep.mubr.f32.mxu0 0.0
  %1533 = vmatmul.mubr.f32.gmra.mrb[0].mxu0 %v964
  %v1534 = vpop.f32.mrb[0].mxu0
  %v1535 = vadd.f32 %v790, %v1534
  %v1536 = vpop.f32.mrb[0].mxu0
  %v1537 = vadd.f32 %v790, %v1536
  %1538 = vmatprep.mubr.f32.mxu0 0.0
  %1539 = vmatmul.mubr.f32.gmra.mrb[0].mxu0 %v967
  %v1540 = vpop.f32.mrb[0].mxu0
  %v1541 = vadd.f32 %v795, %v1540
  %v1542 = vpop.f32.mrb[0].mxu0
  %v1543 = vadd.f32 %v795, %v1542
  %1544 = vmatprep.mubr.f32.mxu0 0.0
  %1545 = vmatmul.mubr.f32.gmra.mrb[0].mxu0 %v970
  %v1546 = vpop.f32.mrb[0].mxu0
  %v1547 = vpop.f32.mrb[0].mxu0
  %1548 = vmatprep.mubr.f32.mxu0 0.0
  %1549 = vmatmul.mubr.f32.gmra.mrb[0].mxu0 %v973
  %v1550 = vpop.f32.mrb[0].mxu0
  %v1551 = vpop.f32.mrb[0].mxu0
  %1552 = vmatprep.mubr.f32.mxu0 0.0
  %1553 = vmatmul.mubr.f32.gmra.mrb[0].mxu0 %v976
  %v1554 = vpop.f32.mrb[0].mxu0
  %v1555 = vpop.f32.mrb[0].mxu0
  %1556 = vmatprep.mubr.f32.mxu0 0.0
  %1557 = vmatmul.mubr.f32.gmra.mrb[0].mxu0 %v979
  %v1558 = vpop.f32.mrb[0].mxu0
  %v1559 = vpop.f32.mrb[0].mxu0
  %1560 = vmatprep.mubr.f32.mxu0 0.0
  %1561 = vmatmul.mubr.f32.gmra.mrb[0].mxu0 %v982
  %v1562 = vpop.f32.mrb[0].mxu0
  %v1563 = vpop.f32.mrb[0].mxu0
  %1564 = vmatprep.mubr.f32.mxu0 0.0
  %1565 = vmatmul.mubr.f32.gmra.mrb[0].mxu0 %v985
  %v1566 = vpop.f32.mrb[0].mxu0
  %v1567 = vpop.f32.mrb[0].mxu0
  %1568 = vmatprep.mubr.f32.mxu0 0.0
  %1569 = vmatmul.mubr.f32.gmra.mrb[0].mxu0 %v988
  %v1570 = vpop.f32.mrb[0].mxu0
  %v1571 = vpop.f32.mrb[0].mxu0
  %1572 = vmatprep.mubr.f32.mxu0 0.0
  %1573 = vmatmul.mubr.f32.gmra.mrb[0].mxu0 %v991
  %v1574 = vpop.f32.mrb[0].mxu0
  %v1575 = vpop.f32.mrb[0].mxu0
  %1576 = vmatprep.mubr.f32.mxu0 0.0
  %1577 = vmatmul.mubr.f32.gmra.mrb[0].mxu0 %v994
  %v1578 = vpop.f32.mrb[0].mxu0
  %v1579 = vpop.f32.mrb[0].mxu0
  %1580 = vmatprep.mubr.f32.mxu0 0.0
  %1581 = vmatmul.mubr.f32.gmra.mrb[0].mxu0 %v997
  %v1582 = vpop.f32.mrb[0].mxu0
  %v1583 = vpop.f32.mrb[0].mxu0
  %1584 = vmatprep.mubr.f32.mxu0 0.0
  %1585 = vmatmul.mubr.f32.gmra.mrb[0].mxu0 %v1000
  %v1586 = vpop.f32.mrb[0].mxu0
  %v1587 = vadd.f32 %v840, %v1586
  %v1588 = vpop.f32.mrb[0].mxu0
  %v1589 = vadd.f32 %v840, %v1588
  %1590 = vmatprep.mubr.f32.mxu0 0.0
  %1591 = vmatmul.mubr.f32.gmra.mrb[0].mxu0 %v1003
  %v1592 = vpop.f32.mrb[0].mxu0
  %v1593 = vadd.f32 %v845, %v1592
  %v1594 = vpop.f32.mrb[0].mxu0
  %v1595 = vadd.f32 %v845, %v1594
  %1596 = vmatprep.mubr.f32.mxu0 0.0
  %1597 = vmatmul.mubr.f32.gmra.mrb[0].mxu0 %v1006
  %v1598 = vpop.f32.mrb[0].mxu0
  %v1599 = vpop.f32.mrb[0].mxu0
  %1600 = vmatprep.mubr.f32.mxu0 0.0
  %1601 = vmatmul.mubr.f32.gmra.mrb[0].mxu0 %v1009
  %v1602 = vpop.f32.mrb[0].mxu0
  %v1603 = vpop.f32.mrb[0].mxu0
  %1604 = vmatprep.mubr.f32.mxu0 0.0
  %1605 = vmatmul.mubr.f32.gmra.mrb[0].mxu0 %v1012
  %v1606 = vpop.f32.mrb[0].mxu0
  %v1607 = vpop.f32.mrb[0].mxu0
  %1608 = vmatprep.mubr.f32.mxu0 0.0
  %1609 = vmatmul.mubr.f32.gmra.mrb[0].mxu0 %v1015
  %v1610 = vpop.f32.mrb[0].mxu0
  %v1611 = vpop.f32.mrb[0].mxu0
  %1612 = vmatprep.mubr.f32.mxu0 0.0
  %1613 = vmatmul.mubr.f32.gmra.mrb[0].mxu0 %v1018
  %v1614 = vpop.f32.mrb[0].mxu0
  %v1615 = vpop.f32.mrb[0].mxu0
  %1616 = vmatprep.mubr.f32.mxu0 0.0
  %1617 = vmatmul.mubr.f32.gmra.mrb[0].mxu0 %v1021
  %v1618 = vpop.f32.mrb[0].mxu0
  %v1619 = vpop.f32.mrb[0].mxu0
  %1620 = vmatprep.mubr.f32.mxu0 0.0
  %1621 = vmatmul.mubr.f32.gmra.mrb[0].mxu0 %v1024
  %v1622 = vpop.f32.mrb[0].mxu0
  %v1623 = vpop.f32.mrb[0].mxu0
  %1624 = vmatprep.mubr.f32.mxu0 0.0
  %1625 = vmatmul.mubr.f32.gmra.mrb[0].mxu0 %v1027
  %v1626 = vpop.f32.mrb[0].mxu0
  %v1627 = vpop.f32.mrb[0].mxu0
  %1628 = vmatprep.mubr.f32.mxu0 0.0
  %1629 = vmatmul.mubr.f32.gmra.mrb[0].mxu0 %v1030
  %v1630 = vpop.f32.mrb[0].mxu0
  %v1631 = vpop.f32.mrb[0].mxu0
  %1632 = vmatprep.mubr.f32.mxu0 0.0
  %1633 = vmatmul.mubr.f32.gmra.mrb[0].mxu0 %v1033
  %v1634 = vpop.f32.mrb[0].mxu0
  %v1635 = vpop.f32.mrb[0].mxu0
  %1636 = vmatprep.mubr.f32.mxu0 0.0
  %1637 = vmatmul.mubr.f32.gmra.mrb[0].mxu0 %v1036
  %v1638 = vpop.f32.mrb[0].mxu0
  %v1639 = vpop.f32.mrb[0].mxu0
  %1640 = vmatprep.mubr.f32.mxu0 0.0
  %1641 = vmatmul.mubr.f32.gmra.mrb[0].mxu0 %v1039
  %v1642 = vpop.f32.mrb[0].mxu0
  %v1643 = vpop.f32.mrb[0].mxu0
  %1644 = vmatprep.mubr.f32.mxu0 0.0
  %1645 = vmatmul.mubr.f32.gmra.mrb[0].mxu0 %v1042
  %v1646 = vpop.f32.mrb[0].mxu0
  %v1647 = vpop.f32.mrb[0].mxu0
  %1648 = vmatprep.mubr.f32.mxu0 0.0
  %1649 = vmatmul.mubr.f32.gmra.mrb[0].mxu0 %v1045
  %v1650 = vpop.f32.mrb[0].mxu0
  %v1651 = vpop.f32.mrb[0].mxu0
  %1652 = vdwg.mxu0
  %v1653 = vld [vmem:[%s7] sm:$0xff]
  %v1654 = vld [vmem:[%s7 + $0x8] sm:$0xff]
  %v1655 = vld [vmem:[%s7 + $0x10] sm:$0xff]
  %v1656 = vld [vmem:[%s7 + $0x18] sm:$0xff]
  %v1657 = vld [vmem:[%s7 + $0x20] sm:$0xff]
  %v1658 = vld [vmem:[%s7 + $0x28] sm:$0xff]
  %v1660 = vsel %vm424, %v1653, 0
  %v1663 = vsel %vm424, %v1654, 0
  %v1666 = vsel %vm424, %v1655, 0
  %v1669 = vsel %vm424, %v1656, 0
  %v1672 = vsel %vm424, %v1657, 0
  %v1675 = vsel %vm424, %v1658, 0
  %1677 = vmatprep.subr.mxu0 %v433
  %1678 = vmatpush1.msra.mxu0 %v430
  %1679 = vmatprep.subr.mxu0 0.0
  %1680 = vmatpush1.msra.mxu0 0.0
  %1681 = vmatprep.subr.mxu0 0.0
  %1682 = vmatpush1.msra.mxu0 0.0
  %1683 = vmatprep.subr.mxu0 0.0
  %1684 = vmatpush1.msra.mxu0 0.0
  %1685 = vmatprep.subr.mxu0 0.0
  %1686 = vmatpush1.msra.mxu0 0.0
  %1687 = vmatprep.subr.mxu0 0.0
  %1688 = vmatpush1.msra.mxu0 0.0
  %1689 = vmatprep.subr.mxu0 0.0
  %1690 = vmatpush1.msra.mxu0 0.0
  %1691 = vmatprep.subr.mxu0 0.0
  %1692 = vmatpush1.msra.mxu0 0.0
  %1693 = vmatprep.subr.mxu0 0.0
  %1694 = vmatpush1.msra.mxu0 0.0
  %1695 = vmatprep.subr.mxu0 0.0
  %1696 = vmatpush1.msra.mxu0 0.0
  %1697 = vmatprep.subr.mxu0 0.0
  %1698 = vmatpush1.msra.mxu0 0.0
  %1699 = vmatprep.subr.mxu0 0.0
  %1700 = vmatpush1.msra.mxu0 0.0
  %1701 = vmatprep.subr.mxu0 0.0
  %1702 = vmatpush1.msra.mxu0 0.0
  %1703 = vmatprep.subr.mxu0 0.0
  %1704 = vmatpush1.msra.mxu0 0.0
  %1705 = vmatprep.subr.mxu0 0.0
  %1706 = vmatpush1.msra.mxu0 0.0
  %1707 = vmatprep.subr.mxu0 0.0
  %1708 = vmatpush1.msra.mxu0 0.0
  %1709 = vmatprep.subr.mxu0 0.0
  %1710 = vmatpush1.msra.mxu0 0.0
  %1711 = vmatprep.subr.mxu0 0.0
  %1712 = vmatpush1.msra.mxu0 0.0
  %1713 = vmatprep.subr.mxu0 0.0
  %1714 = vmatpush1.msra.mxu0 0.0
  %1715 = vmatprep.subr.mxu0 0.0
  %1716 = vmatpush1.msra.mxu0 0.0
  %1717 = vmatprep.subr.mxu0 0.0
  %1718 = vmatpush1.msra.mxu0 0.0
  %1719 = vmatprep.subr.mxu0 0.0
  %1720 = vmatpush1.msra.mxu0 0.0
  %1721 = vmatprep.subr.mxu0 0.0
  %1722 = vmatpush1.msra.mxu0 0.0
  %1723 = vmatprep.subr.mxu0 0.0
  %1724 = vmatpush1.msra.mxu0 0.0
  %1725 = vmatprep.subr.mxu0 0.0
  %1726 = vmatpush1.msra.mxu0 0.0
  %1727 = vmatprep.subr.mxu0 0.0
  %1728 = vmatpush1.msra.mxu0 0.0
  %1729 = vmatprep.subr.mxu0 0.0
  %1730 = vmatpush1.msra.mxu0 0.0
  %1731 = vmatprep.subr.mxu0 0.0
  %1732 = vmatpush1.msra.mxu0 0.0
  %1733 = vmatprep.subr.mxu0 0.0
  %1734 = vmatpush1.msra.mxu0 0.0
  %1735 = vmatprep.subr.mxu0 0.0
  %1736 = vmatpush1.msra.mxu0 0.0
  %1737 = vmatprep.subr.mxu0 0.0
  %1738 = vmatpush1.msra.mxu0 0.0
  %1739 = vmatprep.subr.mxu0 0.0
  %1740 = vmatpush1.msra.mxu0 0.0
  %1741 = vmatprep.mubr.f32.mxu0 0.0
  %1742 = vmatmul.mubr.f32.gmra.mrb[0].mxu0 %v1660
  %v1743 = vpop.f32.mrb[0].mxu0
  %v1744 = vadd.f32 0.0, %v1743
  %v1745 = vpop.f32.mrb[0].mxu0
  %v1746 = vadd.f32 0.0, %v1745
  %1747 = vmatprep.mubr.f32.mxu0 0.0
  %1748 = vmatmul.mubr.f32.gmra.mrb[0].mxu0 %v1663
  %v1749 = vpop.f32.mrb[0].mxu0
  %v1750 = vadd.f32 0.0, %v1749
  %v1751 = vpop.f32.mrb[0].mxu0
  %v1752 = vadd.f32 0.0, %v1751
  %1753 = vmatprep.mubr.f32.mxu0 0.0
  %1754 = vmatmul.mubr.f32.gmra.mrb[0].mxu0 %v1666
  %v1755 = vpop.f32.mrb[0].mxu0
  %v1756 = vadd.f32 0.0, %v1755
  %v1757 = vpop.f32.mrb[0].mxu0
  %v1758 = vadd.f32 0.0, %v1757
  %1759 = vmatprep.mubr.f32.mxu0 0.0
  %1760 = vmatmul.mubr.f32.gmra.mrb[0].mxu0 %v1669
  %v1761 = vpop.f32.mrb[0].mxu0
  %v1762 = vadd.f32 0.0, %v1761
  %v1763 = vpop.f32.mrb[0].mxu0
  %v1764 = vadd.f32 0.0, %v1763
  %1765 = vmatprep.mubr.f32.mxu0 0.0
  %1766 = vmatmul.mubr.f32.gmra.mrb[0].mxu0 %v1672
  %v1767 = vpop.f32.mrb[0].mxu0
  %v1768 = vadd.f32 0.0, %v1767
  %v1769 = vpop.f32.mrb[0].mxu0
  %v1770 = vadd.f32 0.0, %v1769
  %1771 = vmatprep.mubr.f32.mxu0 0.0
  %1772 = vmatmul.mubr.f32.gmra.mrb[0].mxu0 %v1675
  %v1773 = vpop.f32.mrb[0].mxu0
  %v1774 = vadd.f32 0.0, %v1773
  %v1775 = vpop.f32.mrb[0].mxu0
  %v1776 = vadd.f32 0.0, %v1775
  %1777 = vdwg.mxu0
  %1778 = vmatprep.subr.mxu0 %v439
  %1779 = vmatpush1.msra.mxu0 %v436
  %1780 = vmatprep.subr.mxu0 0.0
  %1781 = vmatpush1.msra.mxu0 0.0
  %1782 = vmatprep.subr.mxu0 0.0
  %1783 = vmatpush1.msra.mxu0 0.0
  %1784 = vmatprep.subr.mxu0 0.0
  %1785 = vmatpush1.msra.mxu0 0.0
  %1786 = vmatprep.subr.mxu0 0.0
  %1787 = vmatpush1.msra.mxu0 0.0
  %1788 = vmatprep.subr.mxu0 0.0
  %1789 = vmatpush1.msra.mxu0 0.0
  %1790 = vmatprep.subr.mxu0 0.0
  %1791 = vmatpush1.msra.mxu0 0.0
  %1792 = vmatprep.subr.mxu0 0.0
  %1793 = vmatpush1.msra.mxu0 0.0
  %1794 = vmatprep.subr.mxu0 0.0
  %1795 = vmatpush1.msra.mxu0 0.0
  %1796 = vmatprep.subr.mxu0 0.0
  %1797 = vmatpush1.msra.mxu0 0.0
  %1798 = vmatprep.subr.mxu0 0.0
  %1799 = vmatpush1.msra.mxu0 0.0
  %1800 = vmatprep.subr.mxu0 0.0
  %1801 = vmatpush1.msra.mxu0 0.0
  %1802 = vmatprep.subr.mxu0 0.0
  %1803 = vmatpush1.msra.mxu0 0.0
  %1804 = vmatprep.subr.mxu0 0.0
  %1805 = vmatpush1.msra.mxu0 0.0
  %1806 = vmatprep.subr.mxu0 0.0
  %1807 = vmatpush1.msra.mxu0 0.0
  %1808 = vmatprep.subr.mxu0 0.0
  %1809 = vmatpush1.msra.mxu0 0.0
  %1810 = vmatprep.subr.mxu0 0.0
  %1811 = vmatpush1.msra.mxu0 0.0
  %1812 = vmatprep.subr.mxu0 0.0
  %1813 = vmatpush1.msra.mxu0 0.0
  %1814 = vmatprep.subr.mxu0 0.0
  %1815 = vmatpush1.msra.mxu0 0.0
  %1816 = vmatprep.subr.mxu0 0.0
  %1817 = vmatpush1.msra.mxu0 0.0
  %1818 = vmatprep.subr.mxu0 0.0
  %1819 = vmatpush1.msra.mxu0 0.0
  %1820 = vmatprep.subr.mxu0 0.0
  %1821 = vmatpush1.msra.mxu0 0.0
  %1822 = vmatprep.subr.mxu0 0.0
  %1823 = vmatpush1.msra.mxu0 0.0
  %1824 = vmatprep.subr.mxu0 0.0
  %1825 = vmatpush1.msra.mxu0 0.0
  %1826 = vmatprep.subr.mxu0 0.0
  %1827 = vmatpush1.msra.mxu0 0.0
  %1828 = vmatprep.subr.mxu0 0.0
  %1829 = vmatpush1.msra.mxu0 0.0
  %1830 = vmatprep.subr.mxu0 0.0
  %1831 = vmatpush1.msra.mxu0 0.0
  %1832 = vmatprep.subr.mxu0 0.0
  %1833 = vmatpush1.msra.mxu0 0.0
  %1834 = vmatprep.subr.mxu0 0.0
  %1835 = vmatpush1.msra.mxu0 0.0
  %1836 = vmatprep.subr.mxu0 0.0
  %1837 = vmatpush1.msra.mxu0 0.0
  %1838 = vmatprep.subr.mxu0 0.0
  %1839 = vmatpush1.msra.mxu0 0.0
  %1840 = vmatprep.subr.mxu0 0.0
  %1841 = vmatpush1.msra.mxu0 0.0
  %1842 = vmatprep.mubr.f32.mxu0 0.0
  %1843 = vmatmul.mubr.f32.gmra.mrb[0].mxu0 %v1660
  %v1844 = vpop.f32.mrb[0].mxu0
  %v1845 = vadd.f32 0.0, %v1844
  %v1846 = vpop.f32.mrb[0].mxu0
  %v1847 = vadd.f32 0.0, %v1846
  %1848 = vmatprep.mubr.f32.mxu0 0.0
  %1849 = vmatmul.mubr.f32.gmra.mrb[0].mxu0 %v1663
  %v1850 = vpop.f32.mrb[0].mxu0
  %v1851 = vadd.f32 0.0, %v1850
  %v1852 = vpop.f32.mrb[0].mxu0
  %v1853 = vadd.f32 0.0, %v1852
  %1854 = vmatprep.mubr.f32.mxu0 0.0
  %1855 = vmatmul.mubr.f32.gmra.mrb[0].mxu0 %v1666
  %v1856 = vpop.f32.mrb[0].mxu0
  %v1857 = vadd.f32 0.0, %v1856
  %v1858 = vpop.f32.mrb[0].mxu0
  %v1859 = vadd.f32 0.0, %v1858
  %1860 = vmatprep.mubr.f32.mxu0 0.0
  %1861 = vmatmul.mubr.f32.gmra.mrb[0].mxu0 %v1669
  %v1862 = vpop.f32.mrb[0].mxu0
  %v1863 = vadd.f32 0.0, %v1862
  %v1864 = vpop.f32.mrb[0].mxu0
  %v1865 = vadd.f32 0.0, %v1864
  %1866 = vmatprep.mubr.f32.mxu0 0.0
  %1867 = vmatmul.mubr.f32.gmra.mrb[0].mxu0 %v1672
  %v1868 = vpop.f32.mrb[0].mxu0
  %v1869 = vadd.f32 0.0, %v1868
  %v1870 = vpop.f32.mrb[0].mxu0
  %v1871 = vadd.f32 0.0, %v1870
  %1872 = vmatprep.mubr.f32.mxu0 0.0
  %1873 = vmatmul.mubr.f32.gmra.mrb[0].mxu0 %v1675
  %v1874 = vpop.f32.mrb[0].mxu0
  %v1875 = vadd.f32 0.0, %v1874
  %v1876 = vpop.f32.mrb[0].mxu0
  %v1877 = vadd.f32 0.0, %v1876
  %1878 = vdwg.mxu0
  %v1879 = vld [vmem:[%s8] sm:$0xff]
  %v1880 = vld [vmem:[%s8 + $0x8] sm:$0xf]
  %v1881 = vmul.f32 %v1744, %v1214
  %v1882 = vmul.f32 %v1746, %v1216
  %v1883 = vmul.f32 %v1845, %v1511
  %v1884 = vmul.f32 %v1847, %v1513
  %v1885 = vmul.f32 %v1750, %v1220
  %v1886 = vmul.f32 %v1752, %v1222
  %v1887 = vmul.f32 %v1851, %v1517
  %v1888 = vmul.f32 %v1853, %v1519
  %v1889 = vmul.f32 %v1756, %v1226
  %v1890 = vmul.f32 %v1758, %v1228
  %v1891 = vmul.f32 %v1857, %v1523
  %v1892 = vmul.f32 %v1859, %v1525
  %v1893 = vmul.f32 %v1762, %v1232
  %v1894 = vmul.f32 %v1764, %v1234
  %v1895 = vmul.f32 %v1863, %v1529
  %v1896 = vmul.f32 %v1865, %v1531
  %v1897 = vmul.f32 %v1768, %v1238
  %v1898 = vmul.f32 %v1770, %v1240
  %v1899 = vmul.f32 %v1869, %v1535
  %v1900 = vmul.f32 %v1871, %v1537
  %v1901 = vmul.f32 %v1774, %v1244
  %v1902 = vmul.f32 %v1776, %v1246
  %v1903 = vmul.f32 %v1875, %v1541
  %v1904 = vmul.f32 %v1877, %v1543
  %vm1905 = vcmask 392192
  %v1907 = vsel %vm1905, %v1879, 0
  %v1910 = vsel %vm1905, %v1880, 0
  %1912 = vmatprep.subr.mxu0 %v1882
  %1913 = vmatpush1.msra.mxu0 %v1881
  %1914 = vmatprep.subr.mxu0 %v1886
  %1915 = vmatpush1.msra.mxu0 %v1885
  %1916 = vmatprep.subr.mxu0 %v1890
  %1917 = vmatpush1.msra.mxu0 %v1889
  %1918 = vmatprep.subr.mxu0 %v1894
  %1919 = vmatpush1.msra.mxu0 %v1893
  %1920 = vmatprep.subr.mxu0 %v1898
  %1921 = vmatpush1.msra.mxu0 %v1897
  %1922 = vmatprep.subr.mxu0 %v1902
  %1923 = vmatpush1.msra.mxu0 %v1901
  %1924 = vmatprep.subr.mxu0 0.0
  %1925 = vmatpush1.msra.mxu0 0.0
  %1926 = vmatprep.subr.mxu0 0.0
  %1927 = vmatpush1.msra.mxu0 0.0
  %1928 = vmatprep.subr.mxu0 0.0
  %1929 = vmatpush1.msra.mxu0 0.0
  %1930 = vmatprep.subr.mxu0 0.0
  %1931 = vmatpush1.msra.mxu0 0.0
  %1932 = vmatprep.subr.mxu0 0.0
  %1933 = vmatpush1.msra.mxu0 0.0
  %1934 = vmatprep.subr.mxu0 0.0
  %1935 = vmatpush1.msra.mxu0 0.0
  %1936 = vmatprep.subr.mxu0 0.0
  %1937 = vmatpush1.msra.mxu0 0.0
  %1938 = vmatprep.subr.mxu0 0.0
  %1939 = vmatpush1.msra.mxu0 0.0
  %1940 = vmatprep.subr.mxu0 0.0
  %1941 = vmatpush1.msra.mxu0 0.0
  %1942 = vmatprep.subr.mxu0 0.0
  %1943 = vmatpush1.msra.mxu0 0.0
  %1944 = vmatprep.subr.mxu0 0.0
  %1945 = vmatpush1.msra.mxu0 0.0
  %1946 = vmatprep.subr.mxu0 0.0
  %1947 = vmatpush1.msra.mxu0 0.0
  %1948 = vmatprep.subr.mxu0 0.0
  %1949 = vmatpush1.msra.mxu0 0.0
  %1950 = vmatprep.subr.mxu0 0.0
  %1951 = vmatpush1.msra.mxu0 0.0
  %1952 = vmatprep.subr.mxu0 0.0
  %1953 = vmatpush1.msra.mxu0 0.0
  %1954 = vmatprep.subr.mxu0 0.0
  %1955 = vmatpush1.msra.mxu0 0.0
  %1956 = vmatprep.subr.mxu0 0.0
  %1957 = vmatpush1.msra.mxu0 0.0
  %1958 = vmatprep.subr.mxu0 0.0
  %1959 = vmatpush1.msra.mxu0 0.0
  %1960 = vmatprep.subr.mxu0 0.0
  %1961 = vmatpush1.msra.mxu0 0.0
  %1962 = vmatprep.subr.mxu0 0.0
  %1963 = vmatpush1.msra.mxu0 0.0
  %1964 = vmatprep.subr.mxu0 0.0
  %1965 = vmatpush1.msra.mxu0 0.0
  %1966 = vmatprep.subr.mxu0 0.0
  %1967 = vmatpush1.msra.mxu0 0.0
  %1968 = vmatprep.subr.mxu0 0.0
  %1969 = vmatpush1.msra.mxu0 0.0
  %1970 = vmatprep.subr.mxu0 0.0
  %1971 = vmatpush1.msra.mxu0 0.0
  %1972 = vmatprep.subr.mxu0 0.0
  %1973 = vmatpush1.msra.mxu0 0.0
  %1974 = vmatprep.subr.mxu0 0.0
  %1975 = vmatpush1.msra.mxu0 0.0
  %1976 = vmatprep.mubr.f32.mxu0 0.0
  %1977 = vmatmul.mubr.f32.gmra.mrb[0].mxu0 %v1907
  %v1978 = vpop.f32.mrb[0].mxu0
  %v1979 = vadd.f32 0.0, %v1978
  %v1980 = vpop.f32.mrb[0].mxu0
  %v1981 = vadd.f32 0.0, %v1980
  %1982 = vmatprep.mubr.f32.mxu0 0.0
  %1983 = vmatmul.mubr.f32.gmra.mrb[0].mxu0 %v1910
  %v1984 = vpop.f32.mrb[0].mxu0
  %v1985 = vadd.f32 0.0, %v1984
  %v1986 = vpop.f32.mrb[0].mxu0
  %v1987 = vadd.f32 0.0, %v1986
  %1988 = vdwg.mxu0
  %1989 = vmatprep.subr.mxu0 %v1884
  %1990 = vmatpush1.msra.mxu0 %v1883
  %1991 = vmatprep.subr.mxu0 %v1888
  %1992 = vmatpush1.msra.mxu0 %v1887
  %1993 = vmatprep.subr.mxu0 %v1892
  %1994 = vmatpush1.msra.mxu0 %v1891
  %1995 = vmatprep.subr.mxu0 %v1896
  %1996 = vmatpush1.msra.mxu0 %v1895
  %1997 = vmatprep.subr.mxu0 %v1900
  %1998 = vmatpush1.msra.mxu0 %v1899
  %1999 = vmatprep.subr.mxu0 %v1904
  %2000 = vmatpush1.msra.mxu0 %v1903
  %2001 = vmatprep.subr.mxu0 0.0
  %2002 = vmatpush1.msra.mxu0 0.0
  %2003 = vmatprep.subr.mxu0 0.0
  %2004 = vmatpush1.msra.mxu0 0.0
  %2005 = vmatprep.subr.mxu0 0.0
  %2006 = vmatpush1.msra.mxu0 0.0
  %2007 = vmatprep.subr.mxu0 0.0
  %2008 = vmatpush1.msra.mxu0 0.0
  %2009 = vmatprep.subr.mxu0 0.0
  %2010 = vmatpush1.msra.mxu0 0.0
  %2011 = vmatprep.subr.mxu0 0.0
  %2012 = vmatpush1.msra.mxu0 0.0
  %2013 = vmatprep.subr.mxu0 0.0
  %2014 = vmatpush1.msra.mxu0 0.0
  %2015 = vmatprep.subr.mxu0 0.0
  %2016 = vmatpush1.msra.mxu0 0.0
  %2017 = vmatprep.subr.mxu0 0.0
  %2018 = vmatpush1.msra.mxu0 0.0
  %2019 = vmatprep.subr.mxu0 0.0
  %2020 = vmatpush1.msra.mxu0 0.0
  %2021 = vmatprep.subr.mxu0 0.0
  %2022 = vmatpush1.msra.mxu0 0.0
  %2023 = vmatprep.subr.mxu0 0.0
  %2024 = vmatpush1.msra.mxu0 0.0
  %2025 = vmatprep.subr.mxu0 0.0
  %2026 = vmatpush1.msra.mxu0 0.0
  %2027 = vmatprep.subr.mxu0 0.0
  %2028 = vmatpush1.msra.mxu0 0.0
  %2029 = vmatprep.subr.mxu0 0.0
  %2030 = vmatpush1.msra.mxu0 0.0
  %2031 = vmatprep.subr.mxu0 0.0
  %2032 = vmatpush1.msra.mxu0 0.0
  %2033 = vmatprep.subr.mxu0 0.0
  %2034 = vmatpush1.msra.mxu0 0.0
  %2035 = vmatprep.subr.mxu0 0.0
  %2036 = vmatpush1.msra.mxu0 0.0
  %2037 = vmatprep.subr.mxu0 0.0
  %2038 = vmatpush1.msra.mxu0 0.0
  %2039 = vmatprep.subr.mxu0 0.0
  %2040 = vmatpush1.msra.mxu0 0.0
  %2041 = vmatprep.subr.mxu0 0.0
  %2042 = vmatpush1.msra.mxu0 0.0
  %2043 = vmatprep.subr.mxu0 0.0
  %2044 = vmatpush1.msra.mxu0 0.0
  %2045 = vmatprep.subr.mxu0 0.0
  %2046 = vmatpush1.msra.mxu0 0.0
  %2047 = vmatprep.subr.mxu0 0.0
  %2048 = vmatpush1.msra.mxu0 0.0
  %2049 = vmatprep.subr.mxu0 0.0
  %2050 = vmatpush1.msra.mxu0 0.0
  %2051 = vmatprep.subr.mxu0 0.0
  %2052 = vmatpush1.msra.mxu0 0.0
  %2053 = vmatprep.mubr.f32.mxu0 0.0
  %2054 = vmatmul.mubr.f32.gmra.mrb[0].mxu0 %v1907
  %v2055 = vpop.f32.mrb[0].mxu0
  %v2056 = vadd.f32 0.0, %v2055
  %v2057 = vpop.f32.mrb[0].mxu0
  %v2058 = vadd.f32 0.0, %v2057
  %2059 = vmatprep.mubr.f32.mxu0 0.0
  %2060 = vmatmul.mubr.f32.gmra.mrb[0].mxu0 %v1910
  %v2061 = vpop.f32.mrb[0].mxu0
  %v2062 = vadd.f32 0.0, %v2061
  %v2063 = vpop.f32.mrb[0].mxu0
  %v2064 = vadd.f32 0.0, %v2063
  %2065 = vdwg.mxu0
  %v2066 = vmul.f32 %v1290, %v1979
  %v2067 = vmul.f32 %v1292, %v1981
  %v2068 = vmul.f32 %v1587, %v2056
  %v2069 = vmul.f32 %v1589, %v2058
  %v2070 = vmul.f32 %v1296, %v1985
  %v2071 = vmul.f32 %v1298, %v1987
  %v2072 = vmul.f32 %v1593, %v2062
  %v2073 = vmul.f32 %v1595, %v2064
  %v2074 = vld [vmem:[%s9] sm:$0xff]
  %v2075 = vld [vmem:[%s9 + $0x8] sm:$0xff]
  %v2076 = vld [vmem:[%s9 + $0x10] sm:$0xff]
  %v2077 = vld [vmem:[%s9 + $0x18] sm:$0xff]
  %v2078 = vld [vmem:[%s9 + $0x20] sm:$0xff]
  %v2079 = vld [vmem:[%s9 + $0x28] sm:$0xff]
  %v2080 = vld [vmem:[%s9 + $0x30] sm:$0xff]
  %v2081 = vld [vmem:[%s9 + $0x38] sm:$0xff]
  %v2082 = vld [vmem:[%s9 + $0x40] sm:$0xff]
  %v2083 = vld [vmem:[%s9 + $0x48] sm:$0xff]
  %v2084 = vld [vmem:[%s9 + $0x50] sm:$0xff]
  %v2085 = vld [vmem:[%s9 + $0x58] sm:$0xff]
  %vm2086 = vcmask 97280
  %v2088 = vsel %vm2086, %v2074, 0
  %v2091 = vsel %vm2086, %v2075, 0
  %v2094 = vsel %vm2086, %v2076, 0
  %v2097 = vsel %vm2086, %v2077, 0
  %v2100 = vsel %vm2086, %v2078, 0
  %v2103 = vsel %vm2086, %v2079, 0
  %v2106 = vsel %vm2086, %v2080, 0
  %v2109 = vsel %vm2086, %v2081, 0
  %v2112 = vsel %vm2086, %v2082, 0
  %v2115 = vsel %vm2086, %v2083, 0
  %v2118 = vsel %vm2086, %v2084, 0
  %v2121 = vsel %vm2086, %v2085, 0
  %v2124 = vsel %vm428, %v2070, 0
  %v2127 = vsel %vm428, %v2071, 0
  %v2130 = vsel %vm428, %v2072, 0
  %v2133 = vsel %vm428, %v2073, 0
  %2135 = vmatprep.subr.mxu0 %v2067
  %2136 = vmatpush1.msra.mxu0 %v2066
  %2137 = vmatprep.subr.mxu0 %v2127
  %2138 = vmatpush1.msra.mxu0 %v2124
  %2139 = vmatprep.subr.mxu0 0.0
  %2140 = vmatpush1.msra.mxu0 0.0
  %2141 = vmatprep.subr.mxu0 0.0
  %2142 = vmatpush1.msra.mxu0 0.0
  %2143 = vmatprep.subr.mxu0 0.0
  %2144 = vmatpush1.msra.mxu0 0.0
  %2145 = vmatprep.subr.mxu0 0.0
  %2146 = vmatpush1.msra.mxu0 0.0
  %2147 = vmatprep.subr.mxu0 0.0
  %2148 = vmatpush1.msra.mxu0 0.0
  %2149 = vmatprep.subr.mxu0 0.0
  %2150 = vmatpush1.msra.mxu0 0.0
  %2151 = vmatprep.subr.mxu0 0.0
  %2152 = vmatpush1.msra.mxu0 0.0
  %2153 = vmatprep.subr.mxu0 0.0
  %2154 = vmatpush1.msra.mxu0 0.0
  %2155 = vmatprep.subr.mxu0 0.0
  %2156 = vmatpush1.msra.mxu0 0.0
  %2157 = vmatprep.subr.mxu0 0.0
  %2158 = vmatpush1.msra.mxu0 0.0
  %2159 = vmatprep.subr.mxu0 0.0
  %2160 = vmatpush1.msra.mxu0 0.0
  %2161 = vmatprep.subr.mxu0 0.0
  %2162 = vmatpush1.msra.mxu0 0.0
  %2163 = vmatprep.subr.mxu0 0.0
  %2164 = vmatpush1.msra.mxu0 0.0
  %2165 = vmatprep.subr.mxu0 0.0
  %2166 = vmatpush1.msra.mxu0 0.0
  %2167 = vmatprep.subr.mxu0 0.0
  %2168 = vmatpush1.msra.mxu0 0.0
  %2169 = vmatprep.subr.mxu0 0.0
  %2170 = vmatpush1.msra.mxu0 0.0
  %2171 = vmatprep.subr.mxu0 0.0
  %2172 = vmatpush1.msra.mxu0 0.0
  %2173 = vmatprep.subr.mxu0 0.0
  %2174 = vmatpush1.msra.mxu0 0.0
  %2175 = vmatprep.subr.mxu0 0.0
  %2176 = vmatpush1.msra.mxu0 0.0
  %2177 = vmatprep.subr.mxu0 0.0
  %2178 = vmatpush1.msra.mxu0 0.0
  %2179 = vmatprep.subr.mxu0 0.0
  %2180 = vmatpush1.msra.mxu0 0.0
  %2181 = vmatprep.subr.mxu0 0.0
  %2182 = vmatpush1.msra.mxu0 0.0
  %2183 = vmatprep.subr.mxu0 0.0
  %2184 = vmatpush1.msra.mxu0 0.0
  %2185 = vmatprep.subr.mxu0 0.0
  %2186 = vmatpush1.msra.mxu0 0.0
  %2187 = vmatprep.subr.mxu0 0.0
  %2188 = vmatpush1.msra.mxu0 0.0
  %2189 = vmatprep.subr.mxu0 0.0
  %2190 = vmatpush1.msra.mxu0 0.0
  %2191 = vmatprep.subr.mxu0 0.0
  %2192 = vmatpush1.msra.mxu0 0.0
  %2193 = vmatprep.subr.mxu0 0.0
  %2194 = vmatpush1.msra.mxu0 0.0
  %2195 = vmatprep.subr.mxu0 0.0
  %2196 = vmatpush1.msra.mxu0 0.0
  %2197 = vmatprep.subr.mxu0 0.0
  %2198 = vmatpush1.msra.mxu0 0.0
  %2199 = vmatprep.mubr.f32.mxu0 0.0
  %2200 = vmatmul.mubr.f32.gmra.mrb[0].mxu0 %v2088
  %v2201 = vpop.f32.mrb[0].mxu0
  %v2202 = vadd.f32 0.0, %v2201
  %v2203 = vpop.f32.mrb[0].mxu0
  %v2204 = vadd.f32 0.0, %v2203
  %2205 = vmatprep.mubr.f32.mxu0 0.0
  %2206 = vmatmul.mubr.f32.gmra.mrb[0].mxu0 %v2091
  %v2207 = vpop.f32.mrb[0].mxu0
  %v2208 = vadd.f32 0.0, %v2207
  %v2209 = vpop.f32.mrb[0].mxu0
  %v2210 = vadd.f32 0.0, %v2209
  %2211 = vmatprep.mubr.f32.mxu0 0.0
  %2212 = vmatmul.mubr.f32.gmra.mrb[0].mxu0 %v2094
  %v2213 = vpop.f32.mrb[0].mxu0
  %v2214 = vadd.f32 0.0, %v2213
  %v2215 = vpop.f32.mrb[0].mxu0
  %v2216 = vadd.f32 0.0, %v2215
  %2217 = vmatprep.mubr.f32.mxu0 0.0
  %2218 = vmatmul.mubr.f32.gmra.mrb[0].mxu0 %v2097
  %v2219 = vpop.f32.mrb[0].mxu0
  %v2220 = vadd.f32 0.0, %v2219
  %v2221 = vpop.f32.mrb[0].mxu0
  %v2222 = vadd.f32 0.0, %v2221
  %2223 = vmatprep.mubr.f32.mxu0 0.0
  %2224 = vmatmul.mubr.f32.gmra.mrb[0].mxu0 %v2100
  %v2225 = vpop.f32.mrb[0].mxu0
  %v2226 = vadd.f32 0.0, %v2225
  %v2227 = vpop.f32.mrb[0].mxu0
  %v2228 = vadd.f32 0.0, %v2227
  %2229 = vmatprep.mubr.f32.mxu0 0.0
  %2230 = vmatmul.mubr.f32.gmra.mrb[0].mxu0 %v2103
  %v2231 = vpop.f32.mrb[0].mxu0
  %v2232 = vadd.f32 0.0, %v2231
  %v2233 = vpop.f32.mrb[0].mxu0
  %v2234 = vadd.f32 0.0, %v2233
  %2235 = vmatprep.mubr.f32.mxu0 0.0
  %2236 = vmatmul.mubr.f32.gmra.mrb[0].mxu0 %v2106
  %v2237 = vpop.f32.mrb[0].mxu0
  %v2238 = vadd.f32 0.0, %v2237
  %v2239 = vpop.f32.mrb[0].mxu0
  %v2240 = vadd.f32 0.0, %v2239
  %2241 = vmatprep.mubr.f32.mxu0 0.0
  %2242 = vmatmul.mubr.f32.gmra.mrb[0].mxu0 %v2109
  %v2243 = vpop.f32.mrb[0].mxu0
  %v2244 = vadd.f32 0.0, %v2243
  %v2245 = vpop.f32.mrb[0].mxu0
  %v2246 = vadd.f32 0.0, %v2245
  %2247 = vmatprep.mubr.f32.mxu0 0.0
  %2248 = vmatmul.mubr.f32.gmra.mrb[0].mxu0 %v2112
  %v2249 = vpop.f32.mrb[0].mxu0
  %v2250 = vadd.f32 0.0, %v2249
  %v2251 = vpop.f32.mrb[0].mxu0
  %v2252 = vadd.f32 0.0, %v2251
  %2253 = vmatprep.mubr.f32.mxu0 0.0
  %2254 = vmatmul.mubr.f32.gmra.mrb[0].mxu0 %v2115
  %v2255 = vpop.f32.mrb[0].mxu0
  %v2256 = vadd.f32 0.0, %v2255
  %v2257 = vpop.f32.mrb[0].mxu0
  %v2258 = vadd.f32 0.0, %v2257
  %2259 = vmatprep.mubr.f32.mxu0 0.0
  %2260 = vmatmul.mubr.f32.gmra.mrb[0].mxu0 %v2118
  %v2261 = vpop.f32.mrb[0].mxu0
  %v2262 = vadd.f32 0.0, %v2261
  %v2263 = vpop.f32.mrb[0].mxu0
  %v2264 = vadd.f32 0.0, %v2263
  %2265 = vmatprep.mubr.f32.mxu0 0.0
  %2266 = vmatmul.mubr.f32.gmra.mrb[0].mxu0 %v2121
  %v2267 = vpop.f32.mrb[0].mxu0
  %v2268 = vadd.f32 0.0, %v2267
  %v2269 = vpop.f32.mrb[0].mxu0
  %v2270 = vadd.f32 0.0, %v2269
  %2271 = vdwg.mxu0
  %2272 = vmatprep.subr.mxu0 %v2069
  %2273 = vmatpush1.msra.mxu0 %v2068
  %2274 = vmatprep.subr.mxu0 %v2133
  %2275 = vmatpush1.msra.mxu0 %v2130
  %2276 = vmatprep.subr.mxu0 0.0
  %2277 = vmatpush1.msra.mxu0 0.0
  %2278 = vmatprep.subr.mxu0 0.0
  %2279 = vmatpush1.msra.mxu0 0.0
  %2280 = vmatprep.subr.mxu0 0.0
  %2281 = vmatpush1.msra.mxu0 0.0
  %2282 = vmatprep.subr.mxu0 0.0
  %2283 = vmatpush1.msra.mxu0 0.0
  %2284 = vmatprep.subr.mxu0 0.0
  %2285 = vmatpush1.msra.mxu0 0.0
  %2286 = vmatprep.subr.mxu0 0.0
  %2287 = vmatpush1.msra.mxu0 0.0
  %2288 = vmatprep.subr.mxu0 0.0
  %2289 = vmatpush1.msra.mxu0 0.0
  %2290 = vmatprep.subr.mxu0 0.0
  %2291 = vmatpush1.msra.mxu0 0.0
  %2292 = vmatprep.subr.mxu0 0.0
  %2293 = vmatpush1.msra.mxu0 0.0
  %2294 = vmatprep.subr.mxu0 0.0
  %2295 = vmatpush1.msra.mxu0 0.0
  %2296 = vmatprep.subr.mxu0 0.0
  %2297 = vmatpush1.msra.mxu0 0.0
  %2298 = vmatprep.subr.mxu0 0.0
  %2299 = vmatpush1.msra.mxu0 0.0
  %2300 = vmatprep.subr.mxu0 0.0
  %2301 = vmatpush1.msra.mxu0 0.0
  %2302 = vmatprep.subr.mxu0 0.0
  %2303 = vmatpush1.msra.mxu0 0.0
  %2304 = vmatprep.subr.mxu0 0.0
  %2305 = vmatpush1.msra.mxu0 0.0
  %2306 = vmatprep.subr.mxu0 0.0
  %2307 = vmatpush1.msra.mxu0 0.0
  %2308 = vmatprep.subr.mxu0 0.0
  %2309 = vmatpush1.msra.mxu0 0.0
  %2310 = vmatprep.subr.mxu0 0.0
  %2311 = vmatpush1.msra.mxu0 0.0
  %2312 = vmatprep.subr.mxu0 0.0
  %2313 = vmatpush1.msra.mxu0 0.0
  %2314 = vmatprep.subr.mxu0 0.0
  %2315 = vmatpush1.msra.mxu0 0.0
  %2316 = vmatprep.subr.mxu0 0.0
  %2317 = vmatpush1.msra.mxu0 0.0
  %2318 = vmatprep.subr.mxu0 0.0
  %2319 = vmatpush1.msra.mxu0 0.0
  %2320 = vmatprep.subr.mxu0 0.0
  %2321 = vmatpush1.msra.mxu0 0.0
  %2322 = vmatprep.subr.mxu0 0.0
  %2323 = vmatpush1.msra.mxu0 0.0
  %2324 = vmatprep.subr.mxu0 0.0
  %2325 = vmatpush1.msra.mxu0 0.0
  %2326 = vmatprep.subr.mxu0 0.0
  %2327 = vmatpush1.msra.mxu0 0.0
  %2328 = vmatprep.subr.mxu0 0.0
  %2329 = vmatpush1.msra.mxu0 0.0
  %2330 = vmatprep.subr.mxu0 0.0
  %2331 = vmatpush1.msra.mxu0 0.0
  %2332 = vmatprep.subr.mxu0 0.0
  %2333 = vmatpush1.msra.mxu0 0.0
  %2334 = vmatprep.subr.mxu0 0.0
  %2335 = vmatpush1.msra.mxu0 0.0
  %2336 = vmatprep.mubr.f32.mxu0 0.0
  %2337 = vmatmul.mubr.f32.gmra.mrb[0].mxu0 %v2088
  %v2338 = vpop.f32.mrb[0].mxu0
  %v2339 = vadd.f32 0.0, %v2338
  %v2340 = vpop.f32.mrb[0].mxu0
  %v2341 = vadd.f32 0.0, %v2340
  %2342 = vmatprep.mubr.f32.mxu0 0.0
  %2343 = vmatmul.mubr.f32.gmra.mrb[0].mxu0 %v2091
  %v2344 = vpop.f32.mrb[0].mxu0
  %v2345 = vadd.f32 0.0, %v2344
  %v2346 = vpop.f32.mrb[0].mxu0
  %v2347 = vadd.f32 0.0, %v2346
  %2348 = vmatprep.mubr.f32.mxu0 0.0
  %2349 = vmatmul.mubr.f32.gmra.mrb[0].mxu0 %v2094
  %v2350 = vpop.f32.mrb[0].mxu0
  %v2351 = vadd.f32 0.0, %v2350
  %v2352 = vpop.f32.mrb[0].mxu0
  %v2353 = vadd.f32 0.0, %v2352
  %2354 = vmatprep.mubr.f32.mxu0 0.0
  %2355 = vmatmul.mubr.f32.gmra.mrb[0].mxu0 %v2097
  %v2356 = vpop.f32.mrb[0].mxu0
  %v2357 = vadd.f32 0.0, %v2356
  %v2358 = vpop.f32.mrb[0].mxu0
  %v2359 = vadd.f32 0.0, %v2358
  %2360 = vmatprep.mubr.f32.mxu0 0.0
  %2361 = vmatmul.mubr.f32.gmra.mrb[0].mxu0 %v2100
  %v2362 = vpop.f32.mrb[0].mxu0
  %v2363 = vadd.f32 0.0, %v2362
  %v2364 = vpop.f32.mrb[0].mxu0
  %v2365 = vadd.f32 0.0, %v2364
  %2366 = vmatprep.mubr.f32.mxu0 0.0
  %2367 = vmatmul.mubr.f32.gmra.mrb[0].mxu0 %v2103
  %v2368 = vpop.f32.mrb[0].mxu0
  %v2369 = vadd.f32 0.0, %v2368
  %v2370 = vpop.f32.mrb[0].mxu0
  %v2371 = vadd.f32 0.0, %v2370
  %2372 = vmatprep.mubr.f32.mxu0 0.0
  %2373 = vmatmul.mubr.f32.gmra.mrb[0].mxu0 %v2106
  %v2374 = vpop.f32.mrb[0].mxu0
  %v2375 = vadd.f32 0.0, %v2374
  %v2376 = vpop.f32.mrb[0].mxu0
  %v2377 = vadd.f32 0.0, %v2376
  %2378 = vmatprep.mubr.f32.mxu0 0.0
  %2379 = vmatmul.mubr.f32.gmra.mrb[0].mxu0 %v2109
  %v2380 = vpop.f32.mrb[0].mxu0
  %v2381 = vadd.f32 0.0, %v2380
  %v2382 = vpop.f32.mrb[0].mxu0
  %v2383 = vadd.f32 0.0, %v2382
  %2384 = vmatprep.mubr.f32.mxu0 0.0
  %2385 = vmatmul.mubr.f32.gmra.mrb[0].mxu0 %v2112
  %v2386 = vpop.f32.mrb[0].mxu0
  %v2387 = vadd.f32 0.0, %v2386
  %v2388 = vpop.f32.mrb[0].mxu0
  %v2389 = vadd.f32 0.0, %v2388
  %2390 = vmatprep.mubr.f32.mxu0 0.0
  %2391 = vmatmul.mubr.f32.gmra.mrb[0].mxu0 %v2115
  %v2392 = vpop.f32.mrb[0].mxu0
  %v2393 = vadd.f32 0.0, %v2392
  %v2394 = vpop.f32.mrb[0].mxu0
  %v2395 = vadd.f32 0.0, %v2394
  %2396 = vmatprep.mubr.f32.mxu0 0.0
  %2397 = vmatmul.mubr.f32.gmra.mrb[0].mxu0 %v2118
  %v2398 = vpop.f32.mrb[0].mxu0
  %v2399 = vadd.f32 0.0, %v2398
  %v2400 = vpop.f32.mrb[0].mxu0
  %v2401 = vadd.f32 0.0, %v2400
  %2402 = vmatprep.mubr.f32.mxu0 0.0
  %2403 = vmatmul.mubr.f32.gmra.mrb[0].mxu0 %v2121
  %v2404 = vpop.f32.mrb[0].mxu0
  %v2405 = vadd.f32 0.0, %v2404
  %v2406 = vpop.f32.mrb[0].mxu0
  %v2407 = vadd.f32 0.0, %v2406
  %2408 = vdwg.mxu0
  %v2409 = vld [vmem:[%s10] sm:$0xff]
  %v2410 = vmul.f32 %v1126, %v2202
  %v2411 = vmul.f32 %v1128, %v2204
  %v2412 = vmul.f32 %v1423, %v2339
  %v2413 = vmul.f32 %v1425, %v2341
  %v2414 = vmul.f32 %v1132, %v2208
  %v2415 = vmul.f32 %v1134, %v2210
  %v2416 = vmul.f32 %v1429, %v2345
  %v2417 = vmul.f32 %v1431, %v2347
  %v2418 = vmul.f32 %v1138, %v2214
  %v2419 = vmul.f32 %v1140, %v2216
  %v2420 = vmul.f32 %v1435, %v2351
  %v2421 = vmul.f32 %v1437, %v2353
  %v2422 = vmul.f32 %v1144, %v2220
  %v2423 = vmul.f32 %v1146, %v2222
  %v2424 = vmul.f32 %v1441, %v2357
  %v2425 = vmul.f32 %v1443, %v2359
  %v2426 = vmul.f32 %v1150, %v2226
  %v2427 = vmul.f32 %v1152, %v2228
  %v2428 = vmul.f32 %v1447, %v2363
  %v2429 = vmul.f32 %v1449, %v2365
  %v2430 = vmul.f32 %v1156, %v2232
  %v2431 = vmul.f32 %v1158, %v2234
  %v2432 = vmul.f32 %v1453, %v2369
  %v2433 = vmul.f32 %v1455, %v2371
  %v2434 = vmul.f32 %v1162, %v2238
  %v2435 = vmul.f32 %v1164, %v2240
  %v2436 = vmul.f32 %v1459, %v2375
  %v2437 = vmul.f32 %v1461, %v2377
  %v2438 = vmul.f32 %v1168, %v2244
  %v2439 = vmul.f32 %v1170, %v2246
  %v2440 = vmul.f32 %v1465, %v2381
  %v2441 = vmul.f32 %v1467, %v2383
  %v2442 = vmul.f32 %v1174, %v2250
  %v2443 = vmul.f32 %v1176, %v2252
  %v2444 = vmul.f32 %v1471, %v2387
  %v2445 = vmul.f32 %v1473, %v2389
  %v2446 = vmul.f32 %v1180, %v2256
  %v2447 = vmul.f32 %v1182, %v2258
  %v2448 = vmul.f32 %v1477, %v2393
  %v2449 = vmul.f32 %v1479, %v2395
  %v2450 = vmul.f32 %v1186, %v2262
  %v2451 = vmul.f32 %v1188, %v2264
  %v2452 = vmul.f32 %v1483, %v2399
  %v2453 = vmul.f32 %v1485, %v2401
  %v2454 = vmul.f32 %v1192, %v2268
  %v2455 = vmul.f32 %v1194, %v2270
  %v2456 = vmul.f32 %v1489, %v2405
  %v2457 = vmul.f32 %v1491, %v2407
  %vm2458 = vcmask 785408
  %v2460 = vsel %vm2458, %v2409, 0
  %2462 = vmatprep.subr.mxu0 %v2411
  %2463 = vmatpush1.msra.mxu0 %v2410
  %2464 = vmatprep.subr.mxu0 %v2415
  %2465 = vmatpush1.msra.mxu0 %v2414
  %2466 = vmatprep.subr.mxu0 %v2419
  %2467 = vmatpush1.msra.mxu0 %v2418
  %2468 = vmatprep.subr.mxu0 %v2423
  %2469 = vmatpush1.msra.mxu0 %v2422
  %2470 = vmatprep.subr.mxu0 %v2427
  %2471 = vmatpush1.msra.mxu0 %v2426
  %2472 = vmatprep.subr.mxu0 %v2431
  %2473 = vmatpush1.msra.mxu0 %v2430
  %2474 = vmatprep.subr.mxu0 %v2435
  %2475 = vmatpush1.msra.mxu0 %v2434
  %2476 = vmatprep.subr.mxu0 %v2439
  %2477 = vmatpush1.msra.mxu0 %v2438
  %2478 = vmatprep.subr.mxu0 %v2443
  %2479 = vmatpush1.msra.mxu0 %v2442
  %2480 = vmatprep.subr.mxu0 %v2447
  %2481 = vmatpush1.msra.mxu0 %v2446
  %2482 = vmatprep.subr.mxu0 %v2451
  %2483 = vmatpush1.msra.mxu0 %v2450
  %2484 = vmatprep.subr.mxu0 %v2455
  %2485 = vmatpush1.msra.mxu0 %v2454
  %2486 = vmatprep.subr.mxu0 0.0
  %2487 = vmatpush1.msra.mxu0 0.0
  %2488 = vmatprep.subr.mxu0 0.0
  %2489 = vmatpush1.msra.mxu0 0.0
  %2490 = vmatprep.subr.mxu0 0.0
  %2491 = vmatpush1.msra.mxu0 0.0
  %2492 = vmatprep.subr.mxu0 0.0
  %2493 = vmatpush1.msra.mxu0 0.0
  %2494 = vmatprep.subr.mxu0 0.0
  %2495 = vmatpush1.msra.mxu0 0.0
  %2496 = vmatprep.subr.mxu0 0.0
  %2497 = vmatpush1.msra.mxu0 0.0
  %2498 = vmatprep.subr.mxu0 0.0
  %2499 = vmatpush1.msra.mxu0 0.0
  %2500 = vmatprep.subr.mxu0 0.0
  %2501 = vmatpush1.msra.mxu0 0.0
  %2502 = vmatprep.subr.mxu0 0.0
  %2503 = vmatpush1.msra.mxu0 0.0
  %2504 = vmatprep.subr.mxu0 0.0
  %2505 = vmatpush1.msra.mxu0 0.0
  %2506 = vmatprep.subr.mxu0 0.0
  %2507 = vmatpush1.msra.mxu0 0.0
  %2508 = vmatprep.subr.mxu0 0.0
  %2509 = vmatpush1.msra.mxu0 0.0
  %2510 = vmatprep.subr.mxu0 0.0
  %2511 = vmatpush1.msra.mxu0 0.0
  %2512 = vmatprep.subr.mxu0 0.0
  %2513 = vmatpush1.msra.mxu0 0.0
  %2514 = vmatprep.subr.mxu0 0.0
  %2515 = vmatpush1.msra.mxu0 0.0
  %2516 = vmatprep.subr.mxu0 0.0
  %2517 = vmatpush1.msra.mxu0 0.0
  %2518 = vmatprep.subr.mxu0 0.0
  %2519 = vmatpush1.msra.mxu0 0.0
  %2520 = vmatprep.subr.mxu0 0.0
  %2521 = vmatpush1.msra.mxu0 0.0
  %2522 = vmatprep.subr.mxu0 0.0
  %2523 = vmatpush1.msra.mxu0 0.0
  %2524 = vmatprep.subr.mxu0 0.0
  %2525 = vmatpush1.msra.mxu0 0.0
  %2526 = vmatprep.mubr.f32.mxu0 0.0
  %2527 = vmatmul.mubr.f32.gmra.mrb[0].mxu0 %v2460
  %v2528 = vpop.f32.mrb[0].mxu0
  %v2529 = vadd.f32 0.0, %v2528
  %v2530 = vpop.f32.mrb[0].mxu0
  %v2531 = vadd.f32 0.0, %v2530
  %2532 = vdwg.mxu0
  %2533 = vmatprep.subr.mxu0 %v2413
  %2534 = vmatpush1.msra.mxu0 %v2412
  %2535 = vmatprep.subr.mxu0 %v2417
  %2536 = vmatpush1.msra.mxu0 %v2416
  %2537 = vmatprep.subr.mxu0 %v2421
  %2538 = vmatpush1.msra.mxu0 %v2420
  %2539 = vmatprep.subr.mxu0 %v2425
  %2540 = vmatpush1.msra.mxu0 %v2424
  %2541 = vmatprep.subr.mxu0 %v2429
  %2542 = vmatpush1.msra.mxu0 %v2428
  %2543 = vmatprep.subr.mxu0 %v2433
  %2544 = vmatpush1.msra.mxu0 %v2432
  %2545 = vmatprep.subr.mxu0 %v2437
  %2546 = vmatpush1.msra.mxu0 %v2436
  %2547 = vmatprep.subr.mxu0 %v2441
  %2548 = vmatpush1.msra.mxu0 %v2440
  %2549 = vmatprep.subr.mxu0 %v2445
  %2550 = vmatpush1.msra.mxu0 %v2444
  %2551 = vmatprep.subr.mxu0 %v2449
  %2552 = vmatpush1.msra.mxu0 %v2448
  %2553 = vmatprep.subr.mxu0 %v2453
  %2554 = vmatpush1.msra.mxu0 %v2452
  %2555 = vmatprep.subr.mxu0 %v2457
  %2556 = vmatpush1.msra.mxu0 %v2456
  %2557 = vmatprep.subr.mxu0 0.0
  %2558 = vmatpush1.msra.mxu0 0.0
  %2559 = vmatprep.subr.mxu0 0.0
  %2560 = vmatpush1.msra.mxu0 0.0
  %2561 = vmatprep.subr.mxu0 0.0
  %2562 = vmatpush1.msra.mxu0 0.0
  %2563 = vmatprep.subr.mxu0 0.0
  %2564 = vmatpush1.msra.mxu0 0.0
  %2565 = vmatprep.subr.mxu0 0.0
  %2566 = vmatpush1.msra.mxu0 0.0
  %2567 = vmatprep.subr.mxu0 0.0
  %2568 = vmatpush1.msra.mxu0 0.0
  %2569 = vmatprep.subr.mxu0 0.0
  %2570 = vmatpush1.msra.mxu0 0.0
  %2571 = vmatprep.subr.mxu0 0.0
  %2572 = vmatpush1.msra.mxu0 0.0
  %2573 = vmatprep.subr.mxu0 0.0
  %2574 = vmatpush1.msra.mxu0 0.0
  %2575 = vmatprep.subr.mxu0 0.0
  %2576 = vmatpush1.msra.mxu0 0.0
  %2577 = vmatprep.subr.mxu0 0.0
  %2578 = vmatpush1.msra.mxu0 0.0
  %2579 = vmatprep.subr.mxu0 0.0
  %2580 = vmatpush1.msra.mxu0 0.0
  %2581 = vmatprep.subr.mxu0 0.0
  %2582 = vmatpush1.msra.mxu0 0.0
  %2583 = vmatprep.subr.mxu0 0.0
  %2584 = vmatpush1.msra.mxu0 0.0
  %2585 = vmatprep.subr.mxu0 0.0
  %2586 = vmatpush1.msra.mxu0 0.0
  %2587 = vmatprep.subr.mxu0 0.0
  %2588 = vmatpush1.msra.mxu0 0.0
  %2589 = vmatprep.subr.mxu0 0.0
  %2590 = vmatpush1.msra.mxu0 0.0
  %2591 = vmatprep.subr.mxu0 0.0
  %2592 = vmatpush1.msra.mxu0 0.0
  %2593 = vmatprep.subr.mxu0 0.0
  %2594 = vmatpush1.msra.mxu0 0.0
  %2595 = vmatprep.subr.mxu0 0.0
  %2596 = vmatpush1.msra.mxu0 0.0
  %2597 = vmatprep.mubr.f32.mxu0 0.0
  %2598 = vmatmul.mubr.f32.gmra.mrb[0].mxu0 %v2460
  %v2599 = vpop.f32.mrb[0].mxu0
  %v2600 = vadd.f32 0.0, %v2599
  %v2601 = vpop.f32.mrb[0].mxu0
  %v2602 = vadd.f32 0.0, %v2601
  %2603 = vdwg.mxu0
  %v2604 = vmul.f32 %v413, %v413
  %v2605 = vmul.f32 %v414, %v414
  %v2606 = vmul.f32 %v415, %v415
  %v2607 = vmul.f32 %v416, %v416
  %v2608 = vsel %vm428, %v2604, 0.0
  %v2609 = vrot.slane %v2608, 4
  %v2610 = vadd.f32 %v2608, %v2609
  %v2611 = vrot.slane %v2610, 2
  %v2612 = vadd.f32 %v2610, %v2611
  %v2613 = vrot.slane %v2612, 1
  %v2614 = vadd.f32 %v2612, %v2613
  %v2615 = vsel %vm428, %v2605, 0.0
  %v2616 = vrot.slane %v2615, 4
  %v2617 = vadd.f32 %v2615, %v2616
  %v2618 = vrot.slane %v2617, 2
  %v2619 = vadd.f32 %v2617, %v2618
  %v2620 = vrot.slane %v2619, 1
  %v2621 = vadd.f32 %v2619, %v2620
  %v2622 = vsel %vm428, %v2606, 0.0
  %v2623 = vrot.slane %v2622, 4
  %v2624 = vadd.f32 %v2622, %v2623
  %v2625 = vrot.slane %v2624, 2
  %v2626 = vadd.f32 %v2624, %v2625
  %v2627 = vrot.slane %v2626, 1
  %v2628 = vadd.f32 %v2626, %v2627
  %v2629 = vsel %vm428, %v2607, 0.0
  %v2630 = vrot.slane %v2629, 4
  %v2631 = vadd.f32 %v2629, %v2630
  %v2632 = vrot.slane %v2631, 2
  %v2633 = vadd.f32 %v2631, %v2632
  %v2634 = vrot.slane %v2633, 1
  %v2635 = vadd.f32 %v2633, %v2634
  %v2636 = vsub.f32 0.0, %v2614
  %v2637 = vsub.f32 0.0, %v2621
  %v2638 = vsub.f32 0.0, %v2628
  %v2639 = vsub.f32 0.0, %v2635
  %v2640 = vmul.f32 %v2636, 0.1
  %v2641 = vmul.f32 %v2637, 0.1
  %v2642 = vmul.f32 %v2638, 0.1
  %v2643 = vmul.f32 %v2639, 0.1
  %v2644 = vmul.f32 %v2640, 1.442695
  %v2645 = vpow.pop %v2644
  %v2646 = vmul.f32 %v2641, 1.442695
  %v2647 = vpow.pop %v2646
  %v2648 = vmul.f32 %v2642, 1.442695
  %v2649 = vpow.pop %v2648
  %v2650 = vmul.f32 %v2643, 1.442695
  %v2651 = vpow.pop %v2650
  %v2652 = vmul.f32 %v2529, %v2645
  %v2653 = vmul.f32 %v2531, %v2647
  %v2654 = vmul.f32 %v2600, %v2649
  %v2655 = vmul.f32 %v2602, %v2651
  %v2656 = vadd.f32 %v2652, %v2653
  %v2657 = vadd.f32 %v2656, %v2654
  %v2658 = vadd.f32 %v2657, %v2655
  %v2659 = vmul.f32 %v2658, 0.25
  %v2660 = vld [vmem:[%s11] sm:$0xff]
  %v2661 = vld [vmem:[%s2] sm:$0xff]
  %v2662 = vld [vmem:[%s2 + $0x8] sm:$0xff]
  %v2663 = vld [vmem:[%s2 + $0x10] sm:$0xff]
  %v2664 = vld [vmem:[%s2 + $0x18] sm:$0xff]
  %v2665 = vld [vmem:[%s2 + $0x20] sm:$0xf]
  %vm2666 = vcmask 293888
  %v2668 = vsel %vm2666, %v2660, 0
  %v2671 = vsel %vm428, %v2665, 0
  %2673 = vmatprep.subr.mxu0 0.0
  %2674 = vmatpush1.msra.mxu0 %v2661
  %2675 = vmatprep.subr.mxu0 0.0
  %2676 = vmatpush1.msra.mxu0 %v2662
  %2677 = vmatprep.subr.mxu0 0.0
  %2678 = vmatpush1.msra.mxu0 %v2663
  %2679 = vmatprep.subr.mxu0 0.0
  %2680 = vmatpush1.msra.mxu0 %v2664
  %2681 = vmatprep.subr.mxu0 0.0
  %2682 = vmatpush1.msra.mxu0 %v2671
  %2683 = vmatprep.subr.mxu0 0.0
  %2684 = vmatpush1.msra.mxu0 0.0
  %2685 = vmatprep.subr.mxu0 0.0
  %2686 = vmatpush1.msra.mxu0 0.0
  %2687 = vmatprep.subr.mxu0 0.0
  %2688 = vmatpush1.msra.mxu0 0.0
  %2689 = vmatprep.subr.mxu0 0.0
  %2690 = vmatpush1.msra.mxu0 0.0
  %2691 = vmatprep.subr.mxu0 0.0
  %2692 = vmatpush1.msra.mxu0 0.0
  %2693 = vmatprep.subr.mxu0 0.0
  %2694 = vmatpush1.msra.mxu0 0.0
  %2695 = vmatprep.subr.mxu0 0.0
  %2696 = vmatpush1.msra.mxu0 0.0
  %2697 = vmatprep.subr.mxu0 0.0
  %2698 = vmatpush1.msra.mxu0 0.0
  %2699 = vmatprep.subr.mxu0 0.0
  %2700 = vmatpush1.msra.mxu0 0.0
  %2701 = vmatprep.subr.mxu0 0.0
  %2702 = vmatpush1.msra.mxu0 0.0
  %2703 = vmatprep.subr.mxu0 0.0
  %2704 = vmatpush1.msra.mxu0 0.0
  %2705 = vmatprep.subr.mxu0 0.0
  %2706 = vmatpush1.msra.mxu0 0.0
  %2707 = vmatprep.subr.mxu0 0.0
  %2708 = vmatpush1.msra.mxu0 0.0
  %2709 = vmatprep.subr.mxu0 0.0
  %2710 = vmatpush1.msra.mxu0 0.0
  %2711 = vmatprep.subr.mxu0 0.0
  %2712 = vmatpush1.msra.mxu0 0.0
  %2713 = vmatprep.subr.mxu0 0.0
  %2714 = vmatpush1.msra.mxu0 0.0
  %2715 = vmatprep.subr.mxu0 0.0
  %2716 = vmatpush1.msra.mxu0 0.0
  %2717 = vmatprep.subr.mxu0 0.0
  %2718 = vmatpush1.msra.mxu0 0.0
  %2719 = vmatprep.subr.mxu0 0.0
  %2720 = vmatpush1.msra.mxu0 0.0
  %2721 = vmatprep.subr.mxu0 0.0
  %2722 = vmatpush1.msra.mxu0 0.0
  %2723 = vmatprep.subr.mxu0 0.0
  %2724 = vmatpush1.msra.mxu0 0.0
  %2725 = vmatprep.subr.mxu0 0.0
  %2726 = vmatpush1.msra.mxu0 0.0
  %2727 = vmatprep.subr.mxu0 0.0
  %2728 = vmatpush1.msra.mxu0 0.0
  %2729 = vmatprep.subr.mxu0 0.0
  %2730 = vmatpush1.msra.mxu0 0.0
  %2731 = vmatprep.subr.mxu0 0.0
  %2732 = vmatpush1.msra.mxu0 0.0
  %2733 = vmatprep.subr.mxu0 0.0
  %2734 = vmatpush1.msra.mxu0 0.0
  %2735 = vmatprep.subr.mxu0 0.0
  %2736 = vmatpush1.msra.mxu0 0.0
  %2737 = vmatprep.mubr.f32.mxu0 0.0
  %2738 = vmatmul.mubr.f32.gmra.mrb[0].mxu0 %v2668
  %v2739 = vpop.f32.mrb[0].mxu0
  %v2740 = vadd.f32 0.0, %v2739
  %v2741 = vpop.f32.mrb[0].mxu0
  %2742 = vdwg.mxu0
  %v2743 = vadd.f32 %v2659, %v2740
  %v2744 = vmul.f32 %v2743, 0.5
  %v2745 = vld [vmem:[%s12] sm:$0xff]
  %2747 = vset.pattern.permute.xlu0 0
  %2748 = vperm.xlu0 %2747, %v2745
  %v2749 = vpop.permute.xlu0 %2748
  %v2751 = vadd.f32 %v2744, %v2749
  %2752 = vst [vmem:[%s13] sm:$0xff] %v2751
  // Predicated region
  $region54: #{_lambda_.1} parent=0 // pred_check
    _
  $region55: #{_lambda_.1} parent=0 // pred_check_branch
    %2754 = sbr.rel (0) target = $region57
  $region56: #{_lambda_.1} parent=0 // pred_region
    _
  $region57: #{_lambda_.1} parent=0 // pred_fallthru
    _
  // Predicated region
  $region58: #{_lambda_.1} parent=0 // pred_check
    _
  $region59: #{_lambda_.1} parent=0 // pred_check_branch
    %2756 = sbr.rel (0) target = $region61
  $region60: #{_lambda_.1} parent=0 // pred_region
    _
  $region61: #{_lambda_.1} parent=0 // pred_fallthru
    _

</llo_original>
